<compile_context>
chip_gen: v7x
topology: tpu7x:2x2x1
jax: 0.10.0
libtpu: 0.0.40
codegen_flags: <defaults>
</compile_context>

<pallas_src>
import functools

import jax
import jax.numpy as jnp
from jax.experimental import pallas as pl
from jax.experimental.pallas import tpu as pltpu

LANES = 128  # padded lane width of every feature block


def _elu(x):
    # F.elu with alpha=1.0, overflow-safe in the unselected branch.
    return jnp.where(x > 0, x, jnp.exp(jnp.minimum(x, 0.0)) - 1.0)


def _sigmoid(x):
    return 1.0 / (1.0 + jnp.exp(-x))


def rssm_seq_kernel(
    # per-step streamed inputs (block (1, B, 128))
    state_ref, action_ref, obs_ref, nonterm_ref,
    # initial hidden (resident)
    h0_ref,
    # weights (resident, zero-padded to 128-lane blocks)
    w_sa_ref, b_sa_ref,            # fused fc_state_action      (2*128, 128)
    wi_ref, bi_ref,                # fused GRU input path  [r|z|n] (128, 3*128)
    wh_ref, bh_ref,                # fused GRU hidden path [r|z|n] (128, 3*128)
    w_rh_ref, b_rh_ref,            # fc_rnn_hidden
    w_pr_ref, b_pr_ref,            # fc_prior
    w_rhe_ref, b_rhe_ref,          # fused fc_rnn_hidden_embedding (2*128, 128)
    w_po_ref, b_po_ref,            # fc_posterior
    # per-step streamed outputs
    prior_ref, post_ref, h_out_ref,
    # scratch
    h_scr, sa_scr, he_scr,
):
    P = LANES
    t = pl.program_id(0)
    dot = functools.partial(jnp.dot, preferred_element_type=jnp.float32)

    @pl.when(t == 0)
    def _():
        h_scr[...] = h0_ref[...]

    nt = nonterm_ref[0]                                   # (B, P)

    # hidden = elu(fc_state_action(cat([state*nonterms, action])))  -- one fused dot
    sa_scr[:, 0:P] = state_ref[0] * nt
    sa_scr[:, P:2 * P] = action_ref[0]
    hidden = _elu(dot(sa_scr[...], w_sa_ref[...]) + b_sa_ref[...])

    # GRUCell(hidden, rnn_hidden * nonterms) -- 2 fused gate matmuls
    h_prev = h_scr[...] * nt
    gi = dot(hidden, wi_ref[...]) + bi_ref[...]           # (B, 3P): [r|z|n]
    gh = dot(h_prev, wh_ref[...]) + bh_ref[...]           # (B, 3P): [r|z|n]
    r = _sigmoid(gi[:, 0:P] + gh[:, 0:P])
    z = _sigmoid(gi[:, P:2 * P] + gh[:, P:2 * P])
    n = jnp.tanh(gi[:, 2 * P:3 * P] + r * gh[:, 2 * P:3 * P])
    h_new = (1.0 - z) * n + z * h_prev
    h_scr[...] = h_new                                    # carried recurrence
    h_out_ref[0] = h_new

    # prior head: elu(fc_rnn_hidden(h_new)) -> fc_prior
    hid2 = _elu(dot(h_new, w_rh_ref[...]) + b_rh_ref[...])
    prior_ref[0] = dot(hid2, w_pr_ref[...]) + b_pr_ref[...]

    # posterior head: elu(fc_rnn_hidden_embedding(cat([h_new, obs]))) -> fc_posterior
    he_scr[:, 0:P] = h_new
    he_scr[:, P:2 * P] = obs_ref[0]
    hid3 = _elu(dot(he_scr[...], w_rhe_ref[...]) + b_rhe_ref[...])
    post_ref[0] = dot(hid3, w_po_ref[...]) + b_po_ref[...]


def make_params(key, node_size, embedding_size, action_dim, state_dim, rnn_hidden_dim):
    """Deterministic synthetic parameters, stored un-padded as [in, out]."""
    ks = iter(jax.random.split(key, 16))

    def lin(in_f, out_f):
        bound = 1.0 / float(in_f) ** 0.5
        w = jax.random.uniform(next(ks), (in_f, out_f), jnp.float32, -bound, bound)
        b = jax.random.uniform(next(ks), (1, out_f), jnp.float32, -bound, bound)
        return w, b

    H = rnn_hidden_dim
    p = {}
    # fc_state_action : (state_dim + action_dim) -> node_size (stored split)
    w, b = lin(state_dim + action_dim, node_size)
    p["w_sa_s"], p["w_sa_a"], p["b_sa"] = w[:state_dim], w[state_dim:], b
    # GRUCell(rnn_hidden_dim, rnn_hidden_dim); input is `hidden` (node_size == H)
    bound = 1.0 / float(H) ** 0.5
    p["w_ih_t"] = jax.random.uniform(next(ks), (node_size, 3 * H), jnp.float32, -bound, bound)
    p["w_hh_t"] = jax.random.uniform(next(ks), (H, 3 * H), jnp.float32, -bound, bound)
    p["b_ih"] = jax.random.uniform(next(ks), (1, 3 * H), jnp.float32, -bound, bound)
    p["b_hh"] = jax.random.uniform(next(ks), (1, 3 * H), jnp.float32, -bound, bound)
    # fc_rnn_hidden : H -> node ; fc_prior : node -> state_dim
    p["w_rh"], p["b_rh"] = lin(rnn_hidden_dim, node_size)
    p["w_pr"], p["b_pr"] = lin(node_size, state_dim)
    # fc_rnn_hidden_embedding : (H + embedding) -> node (stored split) ; fc_posterior
    w, b = lin(rnn_hidden_dim + embedding_size, node_size)
    p["w_rhe_h"], p["w_rhe_e"], p["b_rhe"] = w[:rnn_hidden_dim], w[rnn_hidden_dim:], b
    p["w_po"], p["b_po"] = lin(node_size, state_dim)
    return p


def pad_params(p, node_size, embedding_size, action_dim, state_dim, rnn_hidden_dim):
    """Build 128-lane-padded, fused kernel weights (padding rows/cols are zero)."""
    P = LANES
    H = rnn_hidden_dim
    f32 = jnp.float32

    def pad2(w, rows, cols):
        out = jnp.zeros((rows, cols), f32)
        return out.at[:w.shape[0], :w.shape[1]].set(w)

    pp = {}
    # fused fc_state_action: state rows in tile 0, action rows in tile 1
    w_sa = jnp.zeros((2 * P, P), f32)
    w_sa = w_sa.at[:state_dim, :node_size].set(p["w_sa_s"])
    w_sa = w_sa.at[P:P + action_dim, :node_size].set(p["w_sa_a"])
    pp["w_sa"] = w_sa
    pp["b_sa"] = pad2(p["b_sa"], 1, P)

    # fused GRU gates: each gate padded to its own 128-lane block [r|z|n]
    wi = jnp.zeros((P, 3 * P), f32)
    wh = jnp.zeros((P, 3 * P), f32)
    bi = jnp.zeros((1, 3 * P), f32)
    bh = jnp.zeros((1, 3 * P), f32)
    for g in range(3):
        wi = wi.at[:node_size, g * P:g * P + H].set(p["w_ih_t"][:, g * H:(g + 1) * H])
        wh = wh.at[:H, g * P:g * P + H].set(p["w_hh_t"][:, g * H:(g + 1) * H])
        bi = bi.at[:, g * P:g * P + H].set(p["b_ih"][:, g * H:(g + 1) * H])
        bh = bh.at[:, g * P:g * P + H].set(p["b_hh"][:, g * H:(g + 1) * H])
    pp["wi"], pp["bi"], pp["wh"], pp["bh"] = wi, bi, wh, bh

    pp["w_rh"] = pad2(p["w_rh"], P, P)
    pp["b_rh"] = pad2(p["b_rh"], 1, P)
    pp["w_pr"] = pad2(p["w_pr"], P, P)
    pp["b_pr"] = pad2(p["b_pr"], 1, P)

    # fused fc_rnn_hidden_embedding: hidden rows in tile 0, embedding rows in tile 1
    w_rhe = jnp.zeros((2 * P, P), f32)
    w_rhe = w_rhe.at[:H, :node_size].set(p["w_rhe_h"])
    w_rhe = w_rhe.at[P:P + embedding_size, :node_size].set(p["w_rhe_e"])
    pp["w_rhe"] = w_rhe
    pp["b_rhe"] = pad2(p["b_rhe"], 1, P)
    pp["w_po"] = pad2(p["w_po"], P, P)
    pp["b_po"] = pad2(p["b_po"], 1, P)
    return pp


def _pad_last(x, width):
    pad = width - x.shape[-1]
    if pad == 0:
        return x
    return jnp.pad(x, [(0, 0)] * (x.ndim - 1) + [(0, pad)])


@jax.jit
def rssm_forward(params, h0, states, actions, obs, nonterms):
    """T chained RSSM forward() steps in one pallas_call.

    states:(T,B,S) actions:(T,B,A) obs:(T,B,E) nonterms:(T,B,1) h0:(B,H)
    Returns per-step (prior_logit, posterior_logit, rnn_hidden), each (T,B,*).
    """
    T, B, state_dim = states.shape
    H = h0.shape[-1]
    node_size = params["b_sa"].shape[-1]
    action_dim = actions.shape[-1]
    embedding_size = obs.shape[-1]
    P = LANES

    pp = pad_params(params, node_size, embedding_size, action_dim, state_dim, H)

    states_p = _pad_last(states, P)
    actions_p = _pad_last(actions, P)
    obs_p = _pad_last(obs, P)
    nonterms_p = jnp.broadcast_to(nonterms.astype(jnp.float32), (T, B, P))
    h0_p = _pad_last(h0, P)

    step_spec = pl.BlockSpec((1, B, P), lambda t: (t, 0, 0))

    def resident(arr):  # whole array, same block every step -> DMA'd once
        nd = arr.ndim
        return pl.BlockSpec(arr.shape, lambda t, nd=nd: (0,) * nd)

    weight_order = ["w_sa", "b_sa", "wi", "bi", "wh", "bh",
                    "w_rh", "b_rh", "w_pr", "b_pr",
                    "w_rhe", "b_rhe", "w_po", "b_po"]
    weights = [pp[k] for k in weight_order]

    in_specs = ([step_spec, step_spec, step_spec, step_spec, resident(h0_p)]
                + [resident(w) for w in weights])
    out_shapes = (jax.ShapeDtypeStruct((T, B, P), jnp.float32),
                  jax.ShapeDtypeStruct((T, B, P), jnp.float32),
                  jax.ShapeDtypeStruct((T, B, P), jnp.float32))
    out_specs = (step_spec, step_spec, step_spec)

    fn = pl.pallas_call(
        rssm_seq_kernel,
        out_shape=out_shapes,
        grid_spec=pltpu.PrefetchScalarGridSpec(
            num_scalar_prefetch=0,
            grid=(T,),
            in_specs=in_specs,
            out_specs=out_specs,
            scratch_shapes=[
                pltpu.VMEM((B, P), jnp.float32),       # carried rnn_hidden
                pltpu.VMEM((B, 2 * P), jnp.float32),   # [state | action] concat
                pltpu.VMEM((B, 2 * P), jnp.float32),   # [h_new | obs] concat
            ],
        ),
        compiler_params=pltpu.CompilerParams(
            dimension_semantics=("arbitrary",),        # true time recurrence
        ),
    )
    prior_p, post_p, h_p = fn(states_p, actions_p, obs_p, nonterms_p, h0_p, *weights)
    # trim the lane padding in the wrapper (kernel outputs stay lane-dense)
    return prior_p[:, :, :state_dim], post_p[:, :, :state_dim], h_p[:, :, :H]


def rssm_forward_ref(params, h0, states, actions, obs, nonterms):
    """Pure-JAX reference: module.forward() applied T times, carrying rnn_hidden."""
    p = params
    H = h0.shape[-1]
    T = states.shape[0]
    h = h0
    priors, posts, hs = [], [], []
    for t in range(T):
        nt = nonterms[t]
        s = states[t] * nt
        hidden = jax.nn.elu(s @ p["w_sa_s"] + actions[t] @ p["w_sa_a"] + p["b_sa"])
        h_prev = h * nt
        gi = hidden @ p["w_ih_t"] + p["b_ih"]
        gh = h_prev @ p["w_hh_t"] + p["b_hh"]
        r = jax.nn.sigmoid(gi[:, :H] + gh[:, :H])
        z = jax.nn.sigmoid(gi[:, H:2 * H] + gh[:, H:2 * H])
        n = jnp.tanh(gi[:, 2 * H:] + r * gh[:, 2 * H:])
        h = (1.0 - z) * n + z * h_prev
        hid2 = jax.nn.elu(h @ p["w_rh"] + p["b_rh"])
        priors.append(hid2 @ p["w_pr"] + p["b_pr"])
        hid3 = jax.nn.elu(h @ p["w_rhe_h"] + obs[t] @ p["w_rhe_e"] + p["b_rhe"])
        posts.append(hid3 @ p["w_po"] + p["b_po"])
        hs.append(h)
    return jnp.stack(priors), jnp.stack(posts), jnp.stack(hs)


if __name__ == "__main__":
    # small sizes consistent with the module (node_size must equal rnn_hidden_dim
    # for the GRUCell; state_dim = category_size * class_size)
    B = 8                      # >= f32 sublane width
    T = 8                      # timesteps chained inside one kernel call
    node_size = 32
    rnn_hidden_dim = 32
    embedding_size = 48
    action_dim = 8
    category_size, class_size = 4, 8
    state_dim = category_size * class_size  # 32

    key = jax.random.PRNGKey(0)
    kp, ks, ka, kh, ko, kn = jax.random.split(key, 6)

    params = make_params(kp, node_size, embedding_size, action_dim, state_dim,
                         rnn_hidden_dim)
    states = jax.random.normal(ks, (T, B, state_dim), jnp.float32)
    actions = jax.random.normal(ka, (T, B, action_dim), jnp.float32)
    rnn_hidden0 = jax.random.normal(kh, (B, rnn_hidden_dim), jnp.float32)
    embedded_next_obs = jax.random.normal(ko, (T, B, embedding_size), jnp.float32)
    nonterms = (jax.random.uniform(kn, (T, B, 1)) > 0.1).astype(jnp.float32)

    prior, post, h_seq = jax.block_until_ready(
        rssm_forward(params, rnn_hidden0, states, actions, embedded_next_obs, nonterms))

    prior_r, post_r, h_r = rssm_forward_ref(
        params, rnn_hidden0, states, actions, embedded_next_obs, nonterms)

    assert prior.shape == (T, B, state_dim) and post.shape == (T, B, state_dim)
    assert h_seq.shape == (T, B, rnn_hidden_dim)
    assert jnp.allclose(prior, prior_r, atol=1e-4, rtol=1e-4)
    assert jnp.allclose(post, post_r, atol=1e-4, rtol=1e-4)
    assert jnp.allclose(h_seq, h_r, atol=1e-4, rtol=1e-4)

    # TODO(synk): get_dist / get_stoch_state use torch.distributions sampling
    # (OneHotCategorical straight-through); not part of forward(), left out.
    print("KERNEL_OK")
</pallas_src>

<mosaic_0001>
module attributes {stable_mosaic.version = 11 : i64} {
  func.func @rssm_seq_kernel(%arg0: i32, %arg1: memref<1x8x128xf32, #tpu.memory_space<vmem>>, %arg2: memref<1x8x128xf32, #tpu.memory_space<vmem>>, %arg3: memref<1x8x128xf32, #tpu.memory_space<vmem>>, %arg4: memref<1x8x128xf32, #tpu.memory_space<vmem>>, %arg5: memref<8x128xf32, #tpu.memory_space<vmem>>, %arg6: memref<256x128xf32, #tpu.memory_space<vmem>>, %arg7: memref<1x128xf32, #tpu.memory_space<vmem>>, %arg8: memref<128x384xf32, #tpu.memory_space<vmem>>, %arg9: memref<1x384xf32, #tpu.memory_space<vmem>>, %arg10: memref<128x384xf32, #tpu.memory_space<vmem>>, %arg11: memref<1x384xf32, #tpu.memory_space<vmem>>, %arg12: memref<128x128xf32, #tpu.memory_space<vmem>>, %arg13: memref<1x128xf32, #tpu.memory_space<vmem>>, %arg14: memref<128x128xf32, #tpu.memory_space<vmem>>, %arg15: memref<1x128xf32, #tpu.memory_space<vmem>>, %arg16: memref<256x128xf32, #tpu.memory_space<vmem>>, %arg17: memref<1x128xf32, #tpu.memory_space<vmem>>, %arg18: memref<128x128xf32, #tpu.memory_space<vmem>>, %arg19: memref<1x128xf32, #tpu.memory_space<vmem>>, %arg20: memref<1x8x128xf32, #tpu.memory_space<vmem>>, %arg21: memref<1x8x128xf32, #tpu.memory_space<vmem>>, %arg22: memref<1x8x128xf32, #tpu.memory_space<vmem>>, %arg23: memref<8x128xf32, #tpu.memory_space<vmem>>, %arg24: memref<8x256xf32, #tpu.memory_space<vmem>>, %arg25: memref<8x256xf32, #tpu.memory_space<vmem>>) attributes {dimension_semantics = [#tpu.dimension_semantics<arbitrary>], iteration_bounds = array<i64: 8>, scalar_prefetch = 0 : i64, scratch_operands = 3 : i64, tpu.core_type = #tpu.core_type<tc>, window_params = [{transform_indices = @transform_0, window_bounds = array<i64: 1, 8, 128>}, {transform_indices = @transform_1, window_bounds = array<i64: 1, 8, 128>}, {transform_indices = @transform_2, window_bounds = array<i64: 1, 8, 128>}, {transform_indices = @transform_3, window_bounds = array<i64: 1, 8, 128>}, {pipeline_mode = #tpu.pipeline_mode<synchronous>, transform_indices = @transform_4, window_bounds = array<i64: 8, 128>}, {pipeline_mode = #tpu.pipeline_mode<synchronous>, transform_indices = @transform_5, window_bounds = array<i64: 256, 128>}, {pipeline_mode = #tpu.pipeline_mode<synchronous>, transform_indices = @transform_6, window_bounds = array<i64: 1, 128>}, {pipeline_mode = #tpu.pipeline_mode<synchronous>, transform_indices = @transform_7, window_bounds = array<i64: 128, 384>}, {pipeline_mode = #tpu.pipeline_mode<synchronous>, transform_indices = @transform_8, window_bounds = array<i64: 1, 384>}, {pipeline_mode = #tpu.pipeline_mode<synchronous>, transform_indices = @transform_9, window_bounds = array<i64: 128, 384>}, {pipeline_mode = #tpu.pipeline_mode<synchronous>, transform_indices = @transform_10, window_bounds = array<i64: 1, 384>}, {pipeline_mode = #tpu.pipeline_mode<synchronous>, transform_indices = @transform_11, window_bounds = array<i64: 128, 128>}, {pipeline_mode = #tpu.pipeline_mode<synchronous>, transform_indices = @transform_12, window_bounds = array<i64: 1, 128>}, {pipeline_mode = #tpu.pipeline_mode<synchronous>, transform_indices = @transform_13, window_bounds = array<i64: 128, 128>}, {pipeline_mode = #tpu.pipeline_mode<synchronous>, transform_indices = @transform_14, window_bounds = array<i64: 1, 128>}, {pipeline_mode = #tpu.pipeline_mode<synchronous>, transform_indices = @transform_15, window_bounds = array<i64: 256, 128>}, {pipeline_mode = #tpu.pipeline_mode<synchronous>, transform_indices = @transform_16, window_bounds = array<i64: 1, 128>}, {pipeline_mode = #tpu.pipeline_mode<synchronous>, transform_indices = @transform_17, window_bounds = array<i64: 128, 128>}, {pipeline_mode = #tpu.pipeline_mode<synchronous>, transform_indices = @transform_18, window_bounds = array<i64: 1, 128>}, {transform_indices = @transform_19, window_bounds = array<i64: 1, 8, 128>}, {transform_indices = @transform_20, window_bounds = array<i64: 1, 8, 128>}, {transform_indices = @transform_21, window_bounds = array<i64: 1, 8, 128>}]} {
    %c0_i32 = arith.constant 0 : i32
    %0 = arith.cmpi eq, %arg0, %c0_i32 : i32
    %1 = arith.extui %0 : i1 to i32
    %c0_i32_0 = arith.constant 0 : i32
    %2 = arith.cmpi ne, %1, %c0_i32_0 : i32
    scf.if %2 {
      %c0_86 = arith.constant 0 : index
      %c0_87 = arith.constant 0 : index
      %119 = vector.load %arg5[%c0_86, %c0_87] : memref<8x128xf32, #tpu.memory_space<vmem>>, vector<8x128xf32>
      %c0_88 = arith.constant 0 : index
      %c0_89 = arith.constant 0 : index
      %120 = vector.load %arg23[%c0_88, %c0_89] : memref<8x128xf32, #tpu.memory_space<vmem>>, vector<8x128xf32>
      tpu.vector_store %arg23[%c0_88, %c0_89], %119 {strides = array<i32>} : memref<8x128xf32, #tpu.memory_space<vmem>>, vector<8x128xf32>,
    } else {
    }
    %c0 = arith.constant 0 : index
    %c0_1 = arith.constant 0 : index
    %c0_2 = arith.constant 0 : index
    %3 = vector.load %arg4[%c0, %c0_1, %c0_2] : memref<1x8x128xf32, #tpu.memory_space<vmem>>, vector<1x8x128xf32>
    %4 = vector.shape_cast %3 : vector<1x8x128xf32> to vector<8x128xf32>
    %c0_3 = arith.constant 0 : index
    %c0_4 = arith.constant 0 : index
    %c0_5 = arith.constant 0 : index
    %5 = vector.load %arg1[%c0_3, %c0_4, %c0_5] : memref<1x8x128xf32, #tpu.memory_space<vmem>>, vector<1x8x128xf32>
    %6 = vector.shape_cast %5 : vector<1x8x128xf32> to vector<8x128xf32>
    %7 = arith.mulf %6, %4 : vector<8x128xf32>
    %c0_6 = arith.constant 0 : index
    %c0_7 = arith.constant 0 : index
    %8 = vector.load %arg24[%c0_6, %c0_7] : memref<8x256xf32, #tpu.memory_space<vmem>>, vector<8x128xf32>
    tpu.vector_store %arg24[%c0_6, %c0_7], %7 {strides = array<i32>} : memref<8x256xf32, #tpu.memory_space<vmem>>, vector<8x128xf32>,
    %c0_8 = arith.constant 0 : index
    %c0_9 = arith.constant 0 : index
    %c0_10 = arith.constant 0 : index
    %9 = vector.load %arg2[%c0_8, %c0_9, %c0_10] : memref<1x8x128xf32, #tpu.memory_space<vmem>>, vector<1x8x128xf32>
    %10 = vector.shape_cast %9 : vector<1x8x128xf32> to vector<8x128xf32>
    %c0_11 = arith.constant 0 : index
    %c128 = arith.constant 128 : index
    %11 = vector.load %arg24[%c0_11, %c128] : memref<8x256xf32, #tpu.memory_space<vmem>>, vector<8x128xf32>
    tpu.vector_store %arg24[%c0_11, %c128], %10 {strides = array<i32>} : memref<8x256xf32, #tpu.memory_space<vmem>>, vector<8x128xf32>,
    %c0_12 = arith.constant 0 : index
    %c0_13 = arith.constant 0 : index
    %12 = vector.load %arg24[%c0_12, %c0_13] : memref<8x256xf32, #tpu.memory_space<vmem>>, vector<8x256xf32>
    %c0_14 = arith.constant 0 : index
    %c0_15 = arith.constant 0 : index
    %13 = vector.load %arg6[%c0_14, %c0_15] : memref<256x128xf32, #tpu.memory_space<vmem>>, vector<256x128xf32>
    %cst = arith.constant dense<0.000000e+00> : vector<8x128xf32>
    %14 = tpu.matmul %12, %13, %cst {dimension_numbers = #tpu.dot_dimension_numbers<[1], [0], [0], [1], [0, 0, 1, 1], [], []>} : vector<8x256xf32>, vector<256x128xf32>, vector<8x128xf32> -> vector<8x128xf32>
    %c0_16 = arith.constant 0 : index
    %c0_17 = arith.constant 0 : index
    %15 = vector.load %arg7[%c0_16, %c0_17] : memref<1x128xf32, #tpu.memory_space<vmem>>, vector<1x128xf32>
    %16 = vector.broadcast %15 : vector<1x128xf32> to vector<8x128xf32>
    %17 = arith.addf %14, %16 : vector<8x128xf32>
    %cst_18 = arith.constant 0.000000e+00 : f32
    %18 = vector.broadcast %cst_18 : f32 to vector<8x128xf32>
    %19 = arith.cmpf ogt, %17, %18 : vector<8x128xf32>
    %cst_19 = arith.constant 0.000000e+00 : f32
    %20 = vector.broadcast %cst_19 : f32 to vector<8x128xf32>
    %21 = arith.minimumf %17, %20 : vector<8x128xf32>
    %22 = math.exp %21 : vector<8x128xf32>
    %cst_20 = arith.constant 1.000000e+00 : f32
    %23 = vector.broadcast %cst_20 : f32 to vector<8x128xf32>
    %24 = arith.subf %22, %23 : vector<8x128xf32>
    %25 = arith.select %19, %17, %24 : vector<8x128xi1>, vector<8x128xf32>
    %c0_21 = arith.constant 0 : index
    %c0_22 = arith.constant 0 : index
    %26 = vector.load %arg23[%c0_21, %c0_22] : memref<8x128xf32, #tpu.memory_space<vmem>>, vector<8x128xf32>
    %27 = arith.mulf %26, %4 : vector<8x128xf32>
    %c0_23 = arith.constant 0 : index
    %c0_24 = arith.constant 0 : index
    %28 = vector.load %arg8[%c0_23, %c0_24] : memref<128x384xf32, #tpu.memory_space<vmem>>, vector<128x384xf32>
    %cst_25 = arith.constant dense<0.000000e+00> : vector<8x384xf32>
    %29 = tpu.matmul %25, %28, %cst_25 {dimension_numbers = #tpu.dot_dimension_numbers<[1], [0], [0], [1], [0, 0, 1, 1], [], []>} : vector<8x128xf32>, vector<128x384xf32>, vector<8x384xf32> -> vector<8x384xf32>
    %c0_26 = arith.constant 0 : index
    %c0_27 = arith.constant 0 : index
    %30 = vector.load %arg9[%c0_26, %c0_27] : memref<1x384xf32, #tpu.memory_space<vmem>>, vector<1x384xf32>
    %31 = vector.broadcast %30 : vector<1x384xf32> to vector<8x384xf32>
    %32 = arith.addf %29, %31 : vector<8x384xf32>
    %c0_28 = arith.constant 0 : index
    %c0_29 = arith.constant 0 : index
    %33 = vector.load %arg10[%c0_28, %c0_29] : memref<128x384xf32, #tpu.memory_space<vmem>>, vector<128x384xf32>
    %cst_30 = arith.constant dense<0.000000e+00> : vector<8x384xf32>
    %34 = tpu.matmul %27, %33, %cst_30 {dimension_numbers = #tpu.dot_dimension_numbers<[1], [0], [0], [1], [0, 0, 1, 1], [], []>} : vector<8x128xf32>, vector<128x384xf32>, vector<8x384xf32> -> vector<8x384xf32>
    %c0_31 = arith.constant 0 : index
    %c0_32 = arith.constant 0 : index
    %35 = vector.load %arg11[%c0_31, %c0_32] : memref<1x384xf32, #tpu.memory_space<vmem>>, vector<1x384xf32>
    %36 = vector.broadcast %35 : vector<1x384xf32> to vector<8x384xf32>
    %37 = arith.addf %34, %36 : vector<8x384xf32>
    %38 = vector.extract_strided_slice %32 {offsets = [0, 0], sizes = [8, 128], strides = [1, 1]} : vector<8x384xf32> to vector<8x128xf32>
    %39 = vector.extract_strided_slice %37 {offsets = [0, 0], sizes = [8, 128], strides = [1, 1]} : vector<8x384xf32> to vector<8x128xf32>
    %40 = arith.addf %38, %39 : vector<8x128xf32>
    %cst_33 = arith.constant 0.000000e+00 : f32
    %41 = vector.broadcast %cst_33 : f32 to vector<8x128xf32>
    %42 = arith.subf %41, %40 : vector<8x128xf32>
    %43 = math.exp %42 : vector<8x128xf32>
    %cst_34 = arith.constant 1.000000e+00 : f32
    %44 = vector.broadcast %cst_34 : f32 to vector<8x128xf32>
    %45 = arith.addf %44, %43 : vector<8x128xf32>
    %cst_35 = arith.constant 1.000000e+00 : f32
    %46 = vector.broadcast %cst_35 : f32 to vector<8x128xf32>
    %47 = arith.divf %46, %45 : vector<8x128xf32>
    %48 = vector.extract_strided_slice %32 {offsets = [0, 128], sizes = [8, 128], strides = [1, 1]} : vector<8x384xf32> to vector<8x128xf32>
    %49 = vector.extract_strided_slice %37 {offsets = [0, 128], sizes = [8, 128], strides = [1, 1]} : vector<8x384xf32> to vector<8x128xf32>
    %50 = arith.addf %48, %49 : vector<8x128xf32>
    %cst_36 = arith.constant 0.000000e+00 : f32
    %51 = vector.broadcast %cst_36 : f32 to vector<8x128xf32>
    %52 = arith.subf %51, %50 : vector<8x128xf32>
    %53 = math.exp %52 : vector<8x128xf32>
    %cst_37 = arith.constant 1.000000e+00 : f32
    %54 = vector.broadcast %cst_37 : f32 to vector<8x128xf32>
    %55 = arith.addf %54, %53 : vector<8x128xf32>
    %cst_38 = arith.constant 1.000000e+00 : f32
    %56 = vector.broadcast %cst_38 : f32 to vector<8x128xf32>
    %57 = arith.divf %56, %55 : vector<8x128xf32>
    %58 = vector.extract_strided_slice %32 {offsets = [0, 256], sizes = [8, 128], strides = [1, 1]} : vector<8x384xf32> to vector<8x128xf32>
    %59 = vector.extract_strided_slice %37 {offsets = [0, 256], sizes = [8, 128], strides = [1, 1]} : vector<8x384xf32> to vector<8x128xf32>
    %60 = arith.mulf %47, %59 : vector<8x128xf32>
    %61 = arith.addf %58, %60 : vector<8x128xf32>
    %62 = math.tanh %61 : vector<8x128xf32>
    %cst_39 = arith.constant 1.000000e+00 : f32
    %63 = vector.broadcast %cst_39 : f32 to vector<8x128xf32>
    %64 = arith.subf %63, %57 : vector<8x128xf32>
    %65 = arith.mulf %64, %62 : vector<8x128xf32>
    %66 = arith.mulf %57, %27 : vector<8x128xf32>
    %67 = arith.addf %65, %66 : vector<8x128xf32>
    %c0_40 = arith.constant 0 : index
    %c0_41 = arith.constant 0 : index
    %68 = vector.load %arg23[%c0_40, %c0_41] : memref<8x128xf32, #tpu.memory_space<vmem>>, vector<8x128xf32>
    tpu.vector_store %arg23[%c0_40, %c0_41], %67 {strides = array<i32>} : memref<8x128xf32, #tpu.memory_space<vmem>>, vector<8x128xf32>,
    %c0_42 = arith.constant 0 : index
    %c0_43 = arith.constant 0 : index
    %c0_44 = arith.constant 0 : index
    %69 = vector.load %arg22[%c0_42, %c0_43, %c0_44] : memref<1x8x128xf32, #tpu.memory_space<vmem>>, vector<1x8x128xf32>
    %70 = vector.shape_cast %69 : vector<1x8x128xf32> to vector<8x128xf32>
    %71 = vector.shape_cast %67 : vector<8x128xf32> to vector<1x8x128xf32>
    tpu.vector_store %arg22[%c0_42, %c0_43, %c0_44], %71 {strides = array<i32>} : memref<1x8x128xf32, #tpu.memory_space<vmem>>, vector<1x8x128xf32>,
    %c0_45 = arith.constant 0 : index
    %c0_46 = arith.constant 0 : index
    %72 = vector.load %arg12[%c0_45, %c0_46] : memref<128x128xf32, #tpu.memory_space<vmem>>, vector<128x128xf32>
    %cst_47 = arith.constant dense<0.000000e+00> : vector<8x128xf32>
    %73 = tpu.matmul %67, %72, %cst_47 {dimension_numbers = #tpu.dot_dimension_numbers<[1], [0], [0], [1], [0, 0, 1, 1], [], []>} : vector<8x128xf32>, vector<128x128xf32>, vector<8x128xf32> -> vector<8x128xf32>
    %c0_48 = arith.constant 0 : index
    %c0_49 = arith.constant 0 : index
    %74 = vector.load %arg13[%c0_48, %c0_49] : memref<1x128xf32, #tpu.memory_space<vmem>>, vector<1x128xf32>
    %75 = vector.broadcast %74 : vector<1x128xf32> to vector<8x128xf32>
    %76 = arith.addf %73, %75 : vector<8x128xf32>
    %cst_50 = arith.constant 0.000000e+00 : f32
    %77 = vector.broadcast %cst_50 : f32 to vector<8x128xf32>
    %78 = arith.cmpf ogt, %76, %77 : vector<8x128xf32>
    %cst_51 = arith.constant 0.000000e+00 : f32
    %79 = vector.broadcast %cst_51 : f32 to vector<8x128xf32>
    %80 = arith.minimumf %76, %79 : vector<8x128xf32>
    %81 = math.exp %80 : vector<8x128xf32>
    %cst_52 = arith.constant 1.000000e+00 : f32
    %82 = vector.broadcast %cst_52 : f32 to vector<8x128xf32>
    %83 = arith.subf %81, %82 : vector<8x128xf32>
    %84 = arith.select %78, %76, %83 : vector<8x128xi1>, vector<8x128xf32>
    %c0_53 = arith.constant 0 : index
    %c0_54 = arith.constant 0 : index
    %85 = vector.load %arg14[%c0_53, %c0_54] : memref<128x128xf32, #tpu.memory_space<vmem>>, vector<128x128xf32>
    %cst_55 = arith.constant dense<0.000000e+00> : vector<8x128xf32>
    %86 = tpu.matmul %84, %85, %cst_55 {dimension_numbers = #tpu.dot_dimension_numbers<[1], [0], [0], [1], [0, 0, 1, 1], [], []>} : vector<8x128xf32>, vector<128x128xf32>, vector<8x128xf32> -> vector<8x128xf32>
    %c0_56 = arith.constant 0 : index
    %c0_57 = arith.constant 0 : index
    %87 = vector.load %arg15[%c0_56, %c0_57] : memref<1x128xf32, #tpu.memory_space<vmem>>, vector<1x128xf32>
    %88 = vector.broadcast %87 : vector<1x128xf32> to vector<8x128xf32>
    %89 = arith.addf %86, %88 : vector<8x128xf32>
    %c0_58 = arith.constant 0 : index
    %c0_59 = arith.constant 0 : index
    %c0_60 = arith.constant 0 : index
    %90 = vector.load %arg20[%c0_58, %c0_59, %c0_60] : memref<1x8x128xf32, #tpu.memory_space<vmem>>, vector<1x8x128xf32>
    %91 = vector.shape_cast %90 : vector<1x8x128xf32> to vector<8x128xf32>
    %92 = vector.shape_cast %89 : vector<8x128xf32> to vector<1x8x128xf32>
    tpu.vector_store %arg20[%c0_58, %c0_59, %c0_60], %92 {strides = array<i32>} : memref<1x8x128xf32, #tpu.memory_space<vmem>>, vector<1x8x128xf32>,
    %c0_61 = arith.constant 0 : index
    %c0_62 = arith.constant 0 : index
    %93 = vector.load %arg25[%c0_61, %c0_62] : memref<8x256xf32, #tpu.memory_space<vmem>>, vector<8x128xf32>
    tpu.vector_store %arg25[%c0_61, %c0_62], %67 {strides = array<i32>} : memref<8x256xf32, #tpu.memory_space<vmem>>, vector<8x128xf32>,
    %c0_63 = arith.constant 0 : index
    %c0_64 = arith.constant 0 : index
    %c0_65 = arith.constant 0 : index
    %94 = vector.load %arg3[%c0_63, %c0_64, %c0_65] : memref<1x8x128xf32, #tpu.memory_space<vmem>>, vector<1x8x128xf32>
    %95 = vector.shape_cast %94 : vector<1x8x128xf32> to vector<8x128xf32>
    %c0_66 = arith.constant 0 : index
    %c128_67 = arith.constant 128 : index
    %96 = vector.load %arg25[%c0_66, %c128_67] : memref<8x256xf32, #tpu.memory_space<vmem>>, vector<8x128xf32>
    tpu.vector_store %arg25[%c0_66, %c128_67], %95 {strides = array<i32>} : memref<8x256xf32, #tpu.memory_space<vmem>>, vector<8x128xf32>,
    %c0_68 = arith.constant 0 : index
    %c0_69 = arith.constant 0 : index
    %97 = vector.load %arg25[%c0_68, %c0_69] : memref<8x256xf32, #tpu.memory_space<vmem>>, vector<8x256xf32>
    %c0_70 = arith.constant 0 : index
    %c0_71 = arith.constant 0 : index
    %98 = vector.load %arg16[%c0_70, %c0_71] : memref<256x128xf32, #tpu.memory_space<vmem>>, vector<256x128xf32>
    %cst_72 = arith.constant dense<0.000000e+00> : vector<8x128xf32>
    %99 = tpu.matmul %97, %98, %cst_72 {dimension_numbers = #tpu.dot_dimension_numbers<[1], [0], [0], [1], [0, 0, 1, 1], [], []>} : vector<8x256xf32>, vector<256x128xf32>, vector<8x128xf32> -> vector<8x128xf32>
    %c0_73 = arith.constant 0 : index
    %c0_74 = arith.constant 0 : index
    %100 = vector.load %arg17[%c0_73, %c0_74] : memref<1x128xf32, #tpu.memory_space<vmem>>, vector<1x128xf32>
    %101 = vector.broadcast %100 : vector<1x128xf32> to vector<8x128xf32>
    %102 = arith.addf %99, %101 : vector<8x128xf32>
    %cst_75 = arith.constant 0.000000e+00 : f32
    %103 = vector.broadcast %cst_75 : f32 to vector<8x128xf32>
    %104 = arith.cmpf ogt, %102, %103 : vector<8x128xf32>
    %cst_76 = arith.constant 0.000000e+00 : f32
    %105 = vector.broadcast %cst_76 : f32 to vector<8x128xf32>
    %106 = arith.minimumf %102, %105 : vector<8x128xf32>
    %107 = math.exp %106 : vector<8x128xf32>
    %cst_77 = arith.constant 1.000000e+00 : f32
    %108 = vector.broadcast %cst_77 : f32 to vector<8x128xf32>
    %109 = arith.subf %107, %108 : vector<8x128xf32>
    %110 = arith.select %104, %102, %109 : vector<8x128xi1>, vector<8x128xf32>
    %c0_78 = arith.constant 0 : index
    %c0_79 = arith.constant 0 : index
    %111 = vector.load %arg18[%c0_78, %c0_79] : memref<128x128xf32, #tpu.memory_space<vmem>>, vector<128x128xf32>
    %cst_80 = arith.constant dense<0.000000e+00> : vector<8x128xf32>
    %112 = tpu.matmul %110, %111, %cst_80 {dimension_numbers = #tpu.dot_dimension_numbers<[1], [0], [0], [1], [0, 0, 1, 1], [], []>} : vector<8x128xf32>, vector<128x128xf32>, vector<8x128xf32> -> vector<8x128xf32>
    %c0_81 = arith.constant 0 : index
    %c0_82 = arith.constant 0 : index
    %113 = vector.load %arg19[%c0_81, %c0_82] : memref<1x128xf32, #tpu.memory_space<vmem>>, vector<1x128xf32>
    %114 = vector.broadcast %113 : vector<1x128xf32> to vector<8x128xf32>
    %115 = arith.addf %112, %114 : vector<8x128xf32>
    %c0_83 = arith.constant 0 : index
    %c0_84 = arith.constant 0 : index
    %c0_85 = arith.constant 0 : index
    %116 = vector.load %arg21[%c0_83, %c0_84, %c0_85] : memref<1x8x128xf32, #tpu.memory_space<vmem>>, vector<1x8x128xf32>
    %117 = vector.shape_cast %116 : vector<1x8x128xf32> to vector<8x128xf32>
    %118 = vector.shape_cast %115 : vector<8x128xf32> to vector<1x8x128xf32>
    tpu.vector_store %arg21[%c0_83, %c0_84, %c0_85], %118 {strides = array<i32>} : memref<1x8x128xf32, #tpu.memory_space<vmem>>, vector<1x8x128xf32>,
    return
  }
  func.func @transform_0(%arg0: i32) -> (i32, i32, i32) {
    %c0_i32 = arith.constant 0 : i32
    %c0_i32_0 = arith.constant 0 : i32
    %c0_i32_1 = arith.constant 0 : i32
    return %arg0, %c0_i32, %c0_i32_0 : i32, i32, i32
  }
  func.func @transform_1(%arg0: i32) -> (i32, i32, i32) {
    %c0_i32 = arith.constant 0 : i32
    %c0_i32_0 = arith.constant 0 : i32
    %c0_i32_1 = arith.constant 0 : i32
    return %arg0, %c0_i32, %c0_i32_0 : i32, i32, i32
  }
  func.func @transform_2(%arg0: i32) -> (i32, i32, i32) {
    %c0_i32 = arith.constant 0 : i32
    %c0_i32_0 = arith.constant 0 : i32
    %c0_i32_1 = arith.constant 0 : i32
    return %arg0, %c0_i32, %c0_i32_0 : i32, i32, i32
  }
  func.func @transform_3(%arg0: i32) -> (i32, i32, i32) {
    %c0_i32 = arith.constant 0 : i32
    %c0_i32_0 = arith.constant 0 : i32
    %c0_i32_1 = arith.constant 0 : i32
    return %arg0, %c0_i32, %c0_i32_0 : i32, i32, i32
  }
  func.func @transform_4(%arg0: i32) -> (i32, i32) {
    %c0_i32 = arith.constant 0 : i32
    %c0_i32_0 = arith.constant 0 : i32
    %c0_i32_1 = arith.constant 0 : i32
    return %c0_i32, %c0_i32_0 : i32, i32
  }
  func.func @transform_5(%arg0: i32) -> (i32, i32) {
    %c0_i32 = arith.constant 0 : i32
    %c0_i32_0 = arith.constant 0 : i32
    %c0_i32_1 = arith.constant 0 : i32
    return %c0_i32, %c0_i32_0 : i32, i32
  }
  func.func @transform_6(%arg0: i32) -> (i32, i32) {
    %c0_i32 = arith.constant 0 : i32
    %c0_i32_0 = arith.constant 0 : i32
    %c0_i32_1 = arith.constant 0 : i32
    return %c0_i32, %c0_i32_0 : i32, i32
  }
  func.func @transform_7(%arg0: i32) -> (i32, i32) {
    %c0_i32 = arith.constant 0 : i32
    %c0_i32_0 = arith.constant 0 : i32
    %c0_i32_1 = arith.constant 0 : i32
    return %c0_i32, %c0_i32_0 : i32, i32
  }
  func.func @transform_8(%arg0: i32) -> (i32, i32) {
    %c0_i32 = arith.constant 0 : i32
    %c0_i32_0 = arith.constant 0 : i32
    %c0_i32_1 = arith.constant 0 : i32
    return %c0_i32, %c0_i32_0 : i32, i32
  }
  func.func @transform_9(%arg0: i32) -> (i32, i32) {
    %c0_i32 = arith.constant 0 : i32
    %c0_i32_0 = arith.constant 0 : i32
    %c0_i32_1 = arith.constant 0 : i32
    return %c0_i32, %c0_i32_0 : i32, i32
  }
  func.func @transform_10(%arg0: i32) -> (i32, i32) {
    %c0_i32 = arith.constant 0 : i32
    %c0_i32_0 = arith.constant 0 : i32
    %c0_i32_1 = arith.constant 0 : i32
    return %c0_i32, %c0_i32_0 : i32, i32
  }
  func.func @transform_11(%arg0: i32) -> (i32, i32) {
    %c0_i32 = arith.constant 0 : i32
    %c0_i32_0 = arith.constant 0 : i32
    %c0_i32_1 = arith.constant 0 : i32
    return %c0_i32, %c0_i32_0 : i32, i32
  }
  func.func @transform_12(%arg0: i32) -> (i32, i32) {
    %c0_i32 = arith.constant 0 : i32
    %c0_i32_0 = arith.constant 0 : i32
    %c0_i32_1 = arith.constant 0 : i32
    return %c0_i32, %c0_i32_0 : i32, i32
  }
  func.func @transform_13(%arg0: i32) -> (i32, i32) {
    %c0_i32 = arith.constant 0 : i32
    %c0_i32_0 = arith.constant 0 : i32
    %c0_i32_1 = arith.constant 0 : i32
    return %c0_i32, %c0_i32_0 : i32, i32
  }
  func.func @transform_14(%arg0: i32) -> (i32, i32) {
    %c0_i32 = arith.constant 0 : i32
    %c0_i32_0 = arith.constant 0 : i32
    %c0_i32_1 = arith.constant 0 : i32
    return %c0_i32, %c0_i32_0 : i32, i32
  }
  func.func @transform_15(%arg0: i32) -> (i32, i32) {
    %c0_i32 = arith.constant 0 : i32
    %c0_i32_0 = arith.constant 0 : i32
    %c0_i32_1 = arith.constant 0 : i32
    return %c0_i32, %c0_i32_0 : i32, i32
  }
  func.func @transform_16(%arg0: i32) -> (i32, i32) {
    %c0_i32 = arith.constant 0 : i32
    %c0_i32_0 = arith.constant 0 : i32
    %c0_i32_1 = arith.constant 0 : i32
    return %c0_i32, %c0_i32_0 : i32, i32
  }
  func.func @transform_17(%arg0: i32) -> (i32, i32) {
    %c0_i32 = arith.constant 0 : i32
    %c0_i32_0 = arith.constant 0 : i32
    %c0_i32_1 = arith.constant 0 : i32
    return %c0_i32, %c0_i32_0 : i32, i32
  }
  func.func @transform_18(%arg0: i32) -> (i32, i32) {
    %c0_i32 = arith.constant 0 : i32
    %c0_i32_0 = arith.constant 0 : i32
    %c0_i32_1 = arith.constant 0 : i32
    return %c0_i32, %c0_i32_0 : i32, i32
  }
  func.func @transform_19(%arg0: i32) -> (i32, i32, i32) {
    %c0_i32 = arith.constant 0 : i32
    %c0_i32_0 = arith.constant 0 : i32
    %c0_i32_1 = arith.constant 0 : i32
    return %arg0, %c0_i32, %c0_i32_0 : i32, i32, i32
  }
  func.func @transform_20(%arg0: i32) -> (i32, i32, i32) {
    %c0_i32 = arith.constant 0 : i32
    %c0_i32_0 = arith.constant 0 : i32
    %c0_i32_1 = arith.constant 0 : i32
    return %arg0, %c0_i32, %c0_i32_0 : i32, i32, i32
  }
  func.func @transform_21(%arg0: i32) -> (i32, i32, i32) {
    %c0_i32 = arith.constant 0 : i32
    %c0_i32_0 = arith.constant 0 : i32
    %c0_i32_1 = arith.constant 0 : i32
    return %arg0, %c0_i32, %c0_i32_0 : i32, i32, i32
  }
}

</mosaic_0001>

<llo_original>
// kernel: rssm_forward.1
$region0: #{rssm_forward.1}
  #allocation0 [shape = 'u32[]', space=smem, size = 0x4, offset = 0x4, fixed_abs, tag = 'smem constant byte address 0x4 - core index']
  #allocation1 [shape = 'u32[144,128]{1,0:T(1,128)}', space=vmem, size = 0x12000, scoped, tag = 'internal scratch']
  #allocation2 [shape = 'f32[8,128]{1,0:T(8,128)}', space=vmem, size = 0x1000, scoped, tag = 'scratch operand']
  #allocation3 [shape = 'f32[8,256]{1,0:T(8,128)}', space=vmem, size = 0x2000, scoped, tag = 'scratch operand']
  #allocation4 [shape = 'f32[8,256]{1,0:T(8,128)}', space=vmem, size = 0x2000, scoped, tag = 'scratch operand']
  %s0 = inlined_call_operand.vmem [shape: f32[8,8,128], index: 0, kind: input, shape index: {}]
  %s1 = inlined_call_operand.vmem [shape: f32[8,8,128], index: 1, kind: input, shape index: {}]
  %s2 = inlined_call_operand.vmem [shape: f32[8,8,128], index: 2, kind: input, shape index: {}]
  %s3 = inlined_call_operand.vmem [shape: f32[8,8,128], index: 3, kind: input, shape index: {}]
  %s4 = inlined_call_operand.vmem [shape: f32[8,128], index: 4, kind: input, shape index: {}]
  %s5 = inlined_call_operand.vmem [shape: f32[256,128], index: 5, kind: input, shape index: {}]
  %s6 = inlined_call_operand.vmem [shape: f32[1,128], index: 6, kind: input, shape index: {}]
  %s7 = inlined_call_operand.vmem [shape: f32[128,384], index: 7, kind: input, shape index: {}]
  %s8 = inlined_call_operand.vmem [shape: f32[1,384], index: 8, kind: input, shape index: {}]
  %s9 = inlined_call_operand.vmem [shape: f32[128,384], index: 9, kind: input, shape index: {}]
  %s10 = inlined_call_operand.vmem [shape: f32[1,384], index: 10, kind: input, shape index: {}]
  %s11 = inlined_call_operand.vmem [shape: f32[128,128], index: 11, kind: input, shape index: {}]
  %s12 = inlined_call_operand.vmem [shape: f32[1,128], index: 12, kind: input, shape index: {}]
  %s13 = inlined_call_operand.vmem [shape: f32[128,128], index: 13, kind: input, shape index: {}]
  %s14 = inlined_call_operand.vmem [shape: f32[1,128], index: 14, kind: input, shape index: {}]
  %s15 = inlined_call_operand.vmem [shape: f32[256,128], index: 15, kind: input, shape index: {}]
  %s16 = inlined_call_operand.vmem [shape: f32[1,128], index: 16, kind: input, shape index: {}]
  %s17 = inlined_call_operand.vmem [shape: f32[128,128], index: 17, kind: input, shape index: {}]
  %s18 = inlined_call_operand.vmem [shape: f32[1,128], index: 18, kind: input, shape index: {}]
  %s19 = inlined_call_operand.hbm [shape: f32[8,8,128], index: 19, kind: output, shape index: {0}]
  %s20 = inlined_call_operand.hbm [shape: f32[8,8,128], index: 20, kind: output, shape index: {1}]
  %s21 = inlined_call_operand.hbm [shape: f32[8,8,128], index: 21, kind: output, shape index: {2}]
  %22 = xla_tuple %s19, %s20, %s21
  %s23 = sld [smem:[#allocation0]]
  $region129: #{rssm_forward.1} parent=0
    _
  %s25 = ssub.s32 1, %s23
  %s26 = scalar_select 0, %s25, %s23
  $region1: #{rssm_forward.1} parent=0
    #allocation5 [shape = 'u8[8192]{0}', space=vmem, size = 0x2000, scoped, tag = 'output window, operand 0']
    #allocation6 [shape = 's32[2]{0}', space=sflag, size = 0x8, scoped, tag = 'scoped memory for rssm_forward.1']
    #allocation7 [shape = 'u8[8192]{0}', space=vmem, size = 0x2000, scoped, tag = 'output window, operand 1']
    #allocation8 [shape = 's32[2]{0}', space=sflag, size = 0x8, scoped, tag = 'scoped memory for rssm_forward.1']
    #allocation9 [shape = 'u8[8192]{0}', space=vmem, size = 0x2000, scoped, tag = 'output window, operand 2']
    %27 = vsyncpa [#allocation6], 0
    %s28 = scalar_lea.sflag [#allocation6], 1
    %29 = vsyncpa %s28, 0
    %30 = vsyncpa [#allocation8], 0
    %s31 = scalar_lea.sflag [#allocation8], 1
    %32 = vsyncpa %s31, 0
    loop: start=0, step=1, limit=10
    $region2: #{rssm_forward.1} parent=1 // loop_pre_header
      _
    $region3: #{rssm_forward.1} parent=1 // loop_header
      %s34 = sphi 0, %s38
      %p35 = scmp.ge.s32.totalorder %s34, 10
      %s44 = sphi 0, %s46
      %s47 = sphi 0, %s44
      %s48 = sphi 0, %s47
      %s64 = sphi 0, %s48
      %s70 = sphi 0, %s72
      %s73 = sphi 0, %s70
      %s74 = sphi 0, %s73
      %s90 = sphi 0, %s74
      %s96 = sphi 0, %s98
      %s99 = sphi 0, %s96
      %s100 = sphi 0, %s99
      %s116 = sphi 0, %s100
      %s122 = sphi 0, %s124
      %s125 = sphi 0, %s122
      %s126 = sphi 0, %s125
      %s142 = sphi 0, %s126
      %s146 = sphi 0, %s146
      %s148 = sphi 0, %s146
      %s149 = sphi 0, %s148
      %s163 = sphi 0, %s149
      %s167 = sphi 0, %s167
      %s169 = sphi 0, %s167
      %s170 = sphi 0, %s169
      %s184 = sphi 0, %s170
      %s188 = sphi 0, %s188
      %s190 = sphi 0, %s188
      %s191 = sphi 0, %s190
      %s205 = sphi 0, %s191
      %s209 = sphi 0, %s209
      %s211 = sphi 0, %s209
      %s212 = sphi 0, %s211
      %s226 = sphi 0, %s212
      %s230 = sphi 0, %s230
      %s232 = sphi 0, %s230
      %s233 = sphi 0, %s232
      %s247 = sphi 0, %s233
      %s251 = sphi 0, %s251
      %s253 = sphi 0, %s251
      %s254 = sphi 0, %s253
      %s268 = sphi 0, %s254
      %s272 = sphi 0, %s272
      %s274 = sphi 0, %s272
      %s275 = sphi 0, %s274
      %s289 = sphi 0, %s275
      %s293 = sphi 0, %s293
      %s295 = sphi 0, %s293
      %s296 = sphi 0, %s295
      %s310 = sphi 0, %s296
      %s314 = sphi 0, %s314
      %s316 = sphi 0, %s314
      %s317 = sphi 0, %s316
      %s331 = sphi 0, %s317
      %s335 = sphi 0, %s335
      %s337 = sphi 0, %s335
      %s338 = sphi 0, %s337
      %s352 = sphi 0, %s338
      %s356 = sphi 0, %s356
      %s358 = sphi 0, %s356
      %s359 = sphi 0, %s358
      %s373 = sphi 0, %s359
      %s377 = sphi 0, %s377
      %s379 = sphi 0, %s377
      %s380 = sphi 0, %s379
      %s394 = sphi 0, %s380
      %s398 = sphi 0, %s398
      %s400 = sphi 0, %s398
      %s401 = sphi 0, %s400
      %s415 = sphi 0, %s401
      %s419 = sphi 0, %s419
      %s421 = sphi 0, %s419
      %s422 = sphi 0, %s421
      %s436 = sphi 0, %s422
      %s440 = sphi 0, %s440
      %s442 = sphi 0, %s440
      %s443 = sphi 0, %s442
      %s457 = sphi 0, %s443
      %s463 = sphi 0, %s465
      %s466 = sphi 0, %s463
      %s467 = sphi 0, %s466
      %s483 = sphi 0, %s467
      %s489 = sphi 0, %s491
      %s492 = sphi 0, %s489
      %s493 = sphi 0, %s492
      %s509 = sphi 0, %s493
      %s515 = sphi 0, %s517
      %s518 = sphi 0, %s515
      %s519 = sphi 0, %s518
      %s535 = sphi 0, %s519
    $region4: #{rssm_forward.1} parent=1 // loop_header_branch
      %37 = sbr.rel (%p35) target = $region8
    $region5: #{rssm_forward.1} parent=1 // loop_body
      %s39 = ssub.s32 %s34, 1
      %s40 = ssub.s32 %s34, 2
      %s41 = sadd.s32 %s34, 1
      %s42 = ssub.s32 %s34, %s41
      %p43 = scmp.eq.s32.totalorder %s42, 0
      %s45 = sadd.s32 %s44, 1
      %s46 = scalar_select %p43, %s44, %s45
      %p49 = pneg %p43
      %p50 = scmp.eq.s32.totalorder %s34, 7
      %p51 = por %p49, %p50
      %p52 = scmp.ne.s32.totalorder %s44, %s47
      %p53 = scmp.eq.s32.totalorder %s34, 0
      %p54 = por %p52, %p53
      %p55 = scmp.ne.s32.totalorder %s44, %s47
      %p56 = scmp.eq.s32.totalorder %s39, 7
      %p57 = por %p55, %p56
      %p58 = scmp.ne.s32.totalorder %s47, %s48
      %p59 = scmp.eq.s32.totalorder %s39, 0
      %p60 = por %p58, %p59
      %p61 = scmp.ne.s32.totalorder %s47, %s48
      %p62 = scmp.eq.s32.totalorder %s40, 7
      %p63 = por %p61, %p62
      %p65 = scmp.ne.s32.totalorder %s48, %s64
      %p66 = scmp.eq.s32.totalorder %s40, 0
      %p67 = por %p65, %p66
      %s68 = ssub.s32 %s34, %s41
      %p69 = scmp.eq.s32.totalorder %s68, 0
      %s71 = sadd.s32 %s70, 1
      %s72 = scalar_select %p69, %s70, %s71
      %p75 = pneg %p69
      %p76 = scmp.eq.s32.totalorder %s34, 7
      %p77 = por %p75, %p76
      %p78 = scmp.ne.s32.totalorder %s70, %s73
      %p79 = scmp.eq.s32.totalorder %s34, 0
      %p80 = por %p78, %p79
      %p81 = scmp.ne.s32.totalorder %s70, %s73
      %p82 = scmp.eq.s32.totalorder %s39, 7
      %p83 = por %p81, %p82
      %p84 = scmp.ne.s32.totalorder %s73, %s74
      %p85 = scmp.eq.s32.totalorder %s39, 0
      %p86 = por %p84, %p85
      %p87 = scmp.ne.s32.totalorder %s73, %s74
      %p88 = scmp.eq.s32.totalorder %s40, 7
      %p89 = por %p87, %p88
      %p91 = scmp.ne.s32.totalorder %s74, %s90
      %p92 = scmp.eq.s32.totalorder %s40, 0
      %p93 = por %p91, %p92
      %s94 = ssub.s32 %s34, %s41
      %p95 = scmp.eq.s32.totalorder %s94, 0
      %s97 = sadd.s32 %s96, 1
      %s98 = scalar_select %p95, %s96, %s97
      %p101 = pneg %p95
      %p102 = scmp.eq.s32.totalorder %s34, 7
      %p103 = por %p101, %p102
      %p104 = scmp.ne.s32.totalorder %s96, %s99
      %p105 = scmp.eq.s32.totalorder %s34, 0
      %p106 = por %p104, %p105
      %p107 = scmp.ne.s32.totalorder %s96, %s99
      %p108 = scmp.eq.s32.totalorder %s39, 7
      %p109 = por %p107, %p108
      %p110 = scmp.ne.s32.totalorder %s99, %s100
      %p111 = scmp.eq.s32.totalorder %s39, 0
      %p112 = por %p110, %p111
      %p113 = scmp.ne.s32.totalorder %s99, %s100
      %p114 = scmp.eq.s32.totalorder %s40, 7
      %p115 = por %p113, %p114
      %p117 = scmp.ne.s32.totalorder %s100, %s116
      %p118 = scmp.eq.s32.totalorder %s40, 0
      %p119 = por %p117, %p118
      %s120 = ssub.s32 %s34, %s41
      %p121 = scmp.eq.s32.totalorder %s120, 0
      %s123 = sadd.s32 %s122, 1
      %s124 = scalar_select %p121, %s122, %s123
      %p127 = pneg %p121
      %p128 = scmp.eq.s32.totalorder %s34, 7
      %p129 = por %p127, %p128
      %p130 = scmp.ne.s32.totalorder %s122, %s125
      %p131 = scmp.eq.s32.totalorder %s34, 0
      %p132 = por %p130, %p131
      %p133 = scmp.ne.s32.totalorder %s122, %s125
      %p134 = scmp.eq.s32.totalorder %s39, 7
      %p135 = por %p133, %p134
      %p136 = scmp.ne.s32.totalorder %s125, %s126
      %p137 = scmp.eq.s32.totalorder %s39, 0
      %p138 = por %p136, %p137
      %p139 = scmp.ne.s32.totalorder %s125, %s126
      %p140 = scmp.eq.s32.totalorder %s40, 7
      %p141 = por %p139, %p140
      %p143 = scmp.ne.s32.totalorder %s126, %s142
      %p144 = scmp.eq.s32.totalorder %s40, 0
      %p145 = por %p143, %p144
      %s147 = sadd.s32 %s146, 1
      %p150 = scmp.eq.s32.totalorder %s34, 7
      %p151 = scmp.ne.s32.totalorder %s146, %s148
      %p152 = scmp.eq.s32.totalorder %s34, 0
      %p153 = por %p151, %p152
      %p154 = scmp.ne.s32.totalorder %s146, %s148
      %p155 = scmp.eq.s32.totalorder %s39, 7
      %p156 = por %p154, %p155
      %p157 = scmp.ne.s32.totalorder %s148, %s149
      %p158 = scmp.eq.s32.totalorder %s39, 0
      %p159 = por %p157, %p158
      %p160 = scmp.ne.s32.totalorder %s148, %s149
      %p161 = scmp.eq.s32.totalorder %s40, 7
      %p162 = por %p160, %p161
      %p164 = scmp.ne.s32.totalorder %s149, %s163
      %p165 = scmp.eq.s32.totalorder %s40, 0
      %p166 = por %p164, %p165
      %s168 = sadd.s32 %s167, 1
      %p171 = scmp.eq.s32.totalorder %s34, 7
      %p172 = scmp.ne.s32.totalorder %s167, %s169
      %p173 = scmp.eq.s32.totalorder %s34, 0
      %p174 = por %p172, %p173
      %p175 = scmp.ne.s32.totalorder %s167, %s169
      %p176 = scmp.eq.s32.totalorder %s39, 7
      %p177 = por %p175, %p176
      %p178 = scmp.ne.s32.totalorder %s169, %s170
      %p179 = scmp.eq.s32.totalorder %s39, 0
      %p180 = por %p178, %p179
      %p181 = scmp.ne.s32.totalorder %s169, %s170
      %p182 = scmp.eq.s32.totalorder %s40, 7
      %p183 = por %p181, %p182
      %p185 = scmp.ne.s32.totalorder %s170, %s184
      %p186 = scmp.eq.s32.totalorder %s40, 0
      %p187 = por %p185, %p186
      %s189 = sadd.s32 %s188, 1
      %p192 = scmp.eq.s32.totalorder %s34, 7
      %p193 = scmp.ne.s32.totalorder %s188, %s190
      %p194 = scmp.eq.s32.totalorder %s34, 0
      %p195 = por %p193, %p194
      %p196 = scmp.ne.s32.totalorder %s188, %s190
      %p197 = scmp.eq.s32.totalorder %s39, 7
      %p198 = por %p196, %p197
      %p199 = scmp.ne.s32.totalorder %s190, %s191
      %p200 = scmp.eq.s32.totalorder %s39, 0
      %p201 = por %p199, %p200
      %p202 = scmp.ne.s32.totalorder %s190, %s191
      %p203 = scmp.eq.s32.totalorder %s40, 7
      %p204 = por %p202, %p203
      %p206 = scmp.ne.s32.totalorder %s191, %s205
      %p207 = scmp.eq.s32.totalorder %s40, 0
      %p208 = por %p206, %p207
      %s210 = sadd.s32 %s209, 1
      %p213 = scmp.eq.s32.totalorder %s34, 7
      %p214 = scmp.ne.s32.totalorder %s209, %s211
      %p215 = scmp.eq.s32.totalorder %s34, 0
      %p216 = por %p214, %p215
      %p217 = scmp.ne.s32.totalorder %s209, %s211
      %p218 = scmp.eq.s32.totalorder %s39, 7
      %p219 = por %p217, %p218
      %p220 = scmp.ne.s32.totalorder %s211, %s212
      %p221 = scmp.eq.s32.totalorder %s39, 0
      %p222 = por %p220, %p221
      %p223 = scmp.ne.s32.totalorder %s211, %s212
      %p224 = scmp.eq.s32.totalorder %s40, 7
      %p225 = por %p223, %p224
      %p227 = scmp.ne.s32.totalorder %s212, %s226
      %p228 = scmp.eq.s32.totalorder %s40, 0
      %p229 = por %p227, %p228
      %s231 = sadd.s32 %s230, 1
      %p234 = scmp.eq.s32.totalorder %s34, 7
      %p235 = scmp.ne.s32.totalorder %s230, %s232
      %p236 = scmp.eq.s32.totalorder %s34, 0
      %p237 = por %p235, %p236
      %p238 = scmp.ne.s32.totalorder %s230, %s232
      %p239 = scmp.eq.s32.totalorder %s39, 7
      %p240 = por %p238, %p239
      %p241 = scmp.ne.s32.totalorder %s232, %s233
      %p242 = scmp.eq.s32.totalorder %s39, 0
      %p243 = por %p241, %p242
      %p244 = scmp.ne.s32.totalorder %s232, %s233
      %p245 = scmp.eq.s32.totalorder %s40, 7
      %p246 = por %p244, %p245
      %p248 = scmp.ne.s32.totalorder %s233, %s247
      %p249 = scmp.eq.s32.totalorder %s40, 0
      %p250 = por %p248, %p249
      %s252 = sadd.s32 %s251, 1
      %p255 = scmp.eq.s32.totalorder %s34, 7
      %p256 = scmp.ne.s32.totalorder %s251, %s253
      %p257 = scmp.eq.s32.totalorder %s34, 0
      %p258 = por %p256, %p257
      %p259 = scmp.ne.s32.totalorder %s251, %s253
      %p260 = scmp.eq.s32.totalorder %s39, 7
      %p261 = por %p259, %p260
      %p262 = scmp.ne.s32.totalorder %s253, %s254
      %p263 = scmp.eq.s32.totalorder %s39, 0
      %p264 = por %p262, %p263
      %p265 = scmp.ne.s32.totalorder %s253, %s254
      %p266 = scmp.eq.s32.totalorder %s40, 7
      %p267 = por %p265, %p266
      %p269 = scmp.ne.s32.totalorder %s254, %s268
      %p270 = scmp.eq.s32.totalorder %s40, 0
      %p271 = por %p269, %p270
      %s273 = sadd.s32 %s272, 1
      %p276 = scmp.eq.s32.totalorder %s34, 7
      %p277 = scmp.ne.s32.totalorder %s272, %s274
      %p278 = scmp.eq.s32.totalorder %s34, 0
      %p279 = por %p277, %p278
      %p280 = scmp.ne.s32.totalorder %s272, %s274
      %p281 = scmp.eq.s32.totalorder %s39, 7
      %p282 = por %p280, %p281
      %p283 = scmp.ne.s32.totalorder %s274, %s275
      %p284 = scmp.eq.s32.totalorder %s39, 0
      %p285 = por %p283, %p284
      %p286 = scmp.ne.s32.totalorder %s274, %s275
      %p287 = scmp.eq.s32.totalorder %s40, 7
      %p288 = por %p286, %p287
      %p290 = scmp.ne.s32.totalorder %s275, %s289
      %p291 = scmp.eq.s32.totalorder %s40, 0
      %p292 = por %p290, %p291
      %s294 = sadd.s32 %s293, 1
      %p297 = scmp.eq.s32.totalorder %s34, 7
      %p298 = scmp.ne.s32.totalorder %s293, %s295
      %p299 = scmp.eq.s32.totalorder %s34, 0
      %p300 = por %p298, %p299
      %p301 = scmp.ne.s32.totalorder %s293, %s295
      %p302 = scmp.eq.s32.totalorder %s39, 7
      %p303 = por %p301, %p302
      %p304 = scmp.ne.s32.totalorder %s295, %s296
      %p305 = scmp.eq.s32.totalorder %s39, 0
      %p306 = por %p304, %p305
      %p307 = scmp.ne.s32.totalorder %s295, %s296
      %p308 = scmp.eq.s32.totalorder %s40, 7
      %p309 = por %p307, %p308
      %p311 = scmp.ne.s32.totalorder %s296, %s310
      %p312 = scmp.eq.s32.totalorder %s40, 0
      %p313 = por %p311, %p312
      %s315 = sadd.s32 %s314, 1
      %p318 = scmp.eq.s32.totalorder %s34, 7
      %p319 = scmp.ne.s32.totalorder %s314, %s316
      %p320 = scmp.eq.s32.totalorder %s34, 0
      %p321 = por %p319, %p320
      %p322 = scmp.ne.s32.totalorder %s314, %s316
      %p323 = scmp.eq.s32.totalorder %s39, 7
      %p324 = por %p322, %p323
      %p325 = scmp.ne.s32.totalorder %s316, %s317
      %p326 = scmp.eq.s32.totalorder %s39, 0
      %p327 = por %p325, %p326
      %p328 = scmp.ne.s32.totalorder %s316, %s317
      %p329 = scmp.eq.s32.totalorder %s40, 7
      %p330 = por %p328, %p329
      %p332 = scmp.ne.s32.totalorder %s317, %s331
      %p333 = scmp.eq.s32.totalorder %s40, 0
      %p334 = por %p332, %p333
      %s336 = sadd.s32 %s335, 1
      %p339 = scmp.eq.s32.totalorder %s34, 7
      %p340 = scmp.ne.s32.totalorder %s335, %s337
      %p341 = scmp.eq.s32.totalorder %s34, 0
      %p342 = por %p340, %p341
      %p343 = scmp.ne.s32.totalorder %s335, %s337
      %p344 = scmp.eq.s32.totalorder %s39, 7
      %p345 = por %p343, %p344
      %p346 = scmp.ne.s32.totalorder %s337, %s338
      %p347 = scmp.eq.s32.totalorder %s39, 0
      %p348 = por %p346, %p347
      %p349 = scmp.ne.s32.totalorder %s337, %s338
      %p350 = scmp.eq.s32.totalorder %s40, 7
      %p351 = por %p349, %p350
      %p353 = scmp.ne.s32.totalorder %s338, %s352
      %p354 = scmp.eq.s32.totalorder %s40, 0
      %p355 = por %p353, %p354
      %s357 = sadd.s32 %s356, 1
      %p360 = scmp.eq.s32.totalorder %s34, 7
      %p361 = scmp.ne.s32.totalorder %s356, %s358
      %p362 = scmp.eq.s32.totalorder %s34, 0
      %p363 = por %p361, %p362
      %p364 = scmp.ne.s32.totalorder %s356, %s358
      %p365 = scmp.eq.s32.totalorder %s39, 7
      %p366 = por %p364, %p365
      %p367 = scmp.ne.s32.totalorder %s358, %s359
      %p368 = scmp.eq.s32.totalorder %s39, 0
      %p369 = por %p367, %p368
      %p370 = scmp.ne.s32.totalorder %s358, %s359
      %p371 = scmp.eq.s32.totalorder %s40, 7
      %p372 = por %p370, %p371
      %p374 = scmp.ne.s32.totalorder %s359, %s373
      %p375 = scmp.eq.s32.totalorder %s40, 0
      %p376 = por %p374, %p375
      %s378 = sadd.s32 %s377, 1
      %p381 = scmp.eq.s32.totalorder %s34, 7
      %p382 = scmp.ne.s32.totalorder %s377, %s379
      %p383 = scmp.eq.s32.totalorder %s34, 0
      %p384 = por %p382, %p383
      %p385 = scmp.ne.s32.totalorder %s377, %s379
      %p386 = scmp.eq.s32.totalorder %s39, 7
      %p387 = por %p385, %p386
      %p388 = scmp.ne.s32.totalorder %s379, %s380
      %p389 = scmp.eq.s32.totalorder %s39, 0
      %p390 = por %p388, %p389
      %p391 = scmp.ne.s32.totalorder %s379, %s380
      %p392 = scmp.eq.s32.totalorder %s40, 7
      %p393 = por %p391, %p392
      %p395 = scmp.ne.s32.totalorder %s380, %s394
      %p396 = scmp.eq.s32.totalorder %s40, 0
      %p397 = por %p395, %p396
      %s399 = sadd.s32 %s398, 1
      %p402 = scmp.eq.s32.totalorder %s34, 7
      %p403 = scmp.ne.s32.totalorder %s398, %s400
      %p404 = scmp.eq.s32.totalorder %s34, 0
      %p405 = por %p403, %p404
      %p406 = scmp.ne.s32.totalorder %s398, %s400
      %p407 = scmp.eq.s32.totalorder %s39, 7
      %p408 = por %p406, %p407
      %p409 = scmp.ne.s32.totalorder %s400, %s401
      %p410 = scmp.eq.s32.totalorder %s39, 0
      %p411 = por %p409, %p410
      %p412 = scmp.ne.s32.totalorder %s400, %s401
      %p413 = scmp.eq.s32.totalorder %s40, 7
      %p414 = por %p412, %p413
      %p416 = scmp.ne.s32.totalorder %s401, %s415
      %p417 = scmp.eq.s32.totalorder %s40, 0
      %p418 = por %p416, %p417
      %s420 = sadd.s32 %s419, 1
      %p423 = scmp.eq.s32.totalorder %s34, 7
      %p424 = scmp.ne.s32.totalorder %s419, %s421
      %p425 = scmp.eq.s32.totalorder %s34, 0
      %p426 = por %p424, %p425
      %p427 = scmp.ne.s32.totalorder %s419, %s421
      %p428 = scmp.eq.s32.totalorder %s39, 7
      %p429 = por %p427, %p428
      %p430 = scmp.ne.s32.totalorder %s421, %s422
      %p431 = scmp.eq.s32.totalorder %s39, 0
      %p432 = por %p430, %p431
      %p433 = scmp.ne.s32.totalorder %s421, %s422
      %p434 = scmp.eq.s32.totalorder %s40, 7
      %p435 = por %p433, %p434
      %p437 = scmp.ne.s32.totalorder %s422, %s436
      %p438 = scmp.eq.s32.totalorder %s40, 0
      %p439 = por %p437, %p438
      %s441 = sadd.s32 %s440, 1
      %p444 = scmp.eq.s32.totalorder %s34, 7
      %p445 = scmp.ne.s32.totalorder %s440, %s442
      %p446 = scmp.eq.s32.totalorder %s34, 0
      %p447 = por %p445, %p446
      %p448 = scmp.ne.s32.totalorder %s440, %s442
      %p449 = scmp.eq.s32.totalorder %s39, 7
      %p450 = por %p448, %p449
      %p451 = scmp.ne.s32.totalorder %s442, %s443
      %p452 = scmp.eq.s32.totalorder %s39, 0
      %p453 = por %p451, %p452
      %p454 = scmp.ne.s32.totalorder %s442, %s443
      %p455 = scmp.eq.s32.totalorder %s40, 7
      %p456 = por %p454, %p455
      %p458 = scmp.ne.s32.totalorder %s443, %s457
      %p459 = scmp.eq.s32.totalorder %s40, 0
      %p460 = por %p458, %p459
      %s461 = ssub.s32 %s34, %s41
      %p462 = scmp.eq.s32.totalorder %s461, 0
      %s464 = sadd.s32 %s463, 1
      %s465 = scalar_select %p462, %s463, %s464
      %p468 = pneg %p462
      %p469 = scmp.eq.s32.totalorder %s34, 7
      %p470 = por %p468, %p469
      %p471 = scmp.ne.s32.totalorder %s463, %s466
      %p472 = scmp.eq.s32.totalorder %s34, 0
      %p473 = por %p471, %p472
      %p474 = scmp.ne.s32.totalorder %s463, %s466
      %p475 = scmp.eq.s32.totalorder %s39, 7
      %p476 = por %p474, %p475
      %p477 = scmp.ne.s32.totalorder %s466, %s467
      %p478 = scmp.eq.s32.totalorder %s39, 0
      %p479 = por %p477, %p478
      %p480 = scmp.ne.s32.totalorder %s466, %s467
      %p481 = scmp.eq.s32.totalorder %s40, 7
      %p482 = por %p480, %p481
      %p484 = scmp.ne.s32.totalorder %s467, %s483
      %p485 = scmp.eq.s32.totalorder %s40, 0
      %p486 = por %p484, %p485
      %s487 = ssub.s32 %s34, %s41
      %p488 = scmp.eq.s32.totalorder %s487, 0
      %s490 = sadd.s32 %s489, 1
      %s491 = scalar_select %p488, %s489, %s490
      %p494 = pneg %p488
      %p495 = scmp.eq.s32.totalorder %s34, 7
      %p496 = por %p494, %p495
      %p497 = scmp.ne.s32.totalorder %s489, %s492
      %p498 = scmp.eq.s32.totalorder %s34, 0
      %p499 = por %p497, %p498
      %p500 = scmp.ne.s32.totalorder %s489, %s492
      %p501 = scmp.eq.s32.totalorder %s39, 7
      %p502 = por %p500, %p501
      %p503 = scmp.ne.s32.totalorder %s492, %s493
      %p504 = scmp.eq.s32.totalorder %s39, 0
      %p505 = por %p503, %p504
      %p506 = scmp.ne.s32.totalorder %s492, %s493
      %p507 = scmp.eq.s32.totalorder %s40, 7
      %p508 = por %p506, %p507
      %p510 = scmp.ne.s32.totalorder %s493, %s509
      %p511 = scmp.eq.s32.totalorder %s40, 0
      %p512 = por %p510, %p511
      %s513 = ssub.s32 %s34, %s41
      %p514 = scmp.eq.s32.totalorder %s513, 0
      %s516 = sadd.s32 %s515, 1
      %s517 = scalar_select %p514, %s515, %s516
      %p520 = pneg %p514
      %p521 = scmp.eq.s32.totalorder %s34, 7
      %p522 = por %p520, %p521
      %p523 = scmp.ne.s32.totalorder %s515, %s518
      %p524 = scmp.eq.s32.totalorder %s34, 0
      %p525 = por %p523, %p524
      %p526 = scmp.ne.s32.totalorder %s515, %s518
      %p527 = scmp.eq.s32.totalorder %s39, 7
      %p528 = por %p526, %p527
      %p529 = scmp.ne.s32.totalorder %s518, %s519
      %p530 = scmp.eq.s32.totalorder %s39, 0
      %p531 = por %p529, %p530
      %p532 = scmp.ne.s32.totalorder %s518, %s519
      %p533 = scmp.eq.s32.totalorder %s40, 7
      %p534 = por %p532, %p533
      %p536 = scmp.ne.s32.totalorder %s519, %s535
      %p537 = scmp.eq.s32.totalorder %s40, 0
      %p538 = por %p536, %p537
      %p539 = scmp.le.s32.totalorder 1, %s34
      %p540 = scmp.lt.s32.totalorder %s34, 9
      %p541 = pnand %p539, %p540
      %p542 = pneg %p541
      // Predicated region
      $region9: #{rssm_forward.1} parent=5 // pred_check
        _
      $region10: #{rssm_forward.1} parent=5 // pred_check_branch
        %544 = sbr.rel (%p541) target = $region12
      $region11: #{rssm_forward.1} parent=5 // pred_region
        %s545 = ssub.s32 %s34, 1
        // Predicated region
        $region13: #{rssm_forward.1} parent=11 // pred_check
          %p546 = pneg %p159
        $region14: #{rssm_forward.1} parent=11 // pred_check_branch
          %548 = sbr.rel (%p546) target = $region16
        $region15: #{rssm_forward.1} parent=11 // pred_region
          _
        $region16: #{rssm_forward.1} parent=11 // pred_fallthru
          _
        // Predicated region
        $region17: #{rssm_forward.1} parent=11 // pred_check
          %p549 = pneg %p180
        $region18: #{rssm_forward.1} parent=11 // pred_check_branch
          %551 = sbr.rel (%p549) target = $region20
        $region19: #{rssm_forward.1} parent=11 // pred_region
          _
        $region20: #{rssm_forward.1} parent=11 // pred_fallthru
          _
        // Predicated region
        $region21: #{rssm_forward.1} parent=11 // pred_check
          %p552 = pneg %p201
        $region22: #{rssm_forward.1} parent=11 // pred_check_branch
          %554 = sbr.rel (%p552) target = $region24
        $region23: #{rssm_forward.1} parent=11 // pred_region
          _
        $region24: #{rssm_forward.1} parent=11 // pred_fallthru
          _
        // Predicated region
        $region25: #{rssm_forward.1} parent=11 // pred_check
          %p555 = pneg %p222
        $region26: #{rssm_forward.1} parent=11 // pred_check_branch
          %557 = sbr.rel (%p555) target = $region28
        $region27: #{rssm_forward.1} parent=11 // pred_region
          _
        $region28: #{rssm_forward.1} parent=11 // pred_fallthru
          _
        // Predicated region
        $region29: #{rssm_forward.1} parent=11 // pred_check
          %p558 = pneg %p243
        $region30: #{rssm_forward.1} parent=11 // pred_check_branch
          %560 = sbr.rel (%p558) target = $region32
        $region31: #{rssm_forward.1} parent=11 // pred_region
          _
        $region32: #{rssm_forward.1} parent=11 // pred_fallthru
          _
        // Predicated region
        $region33: #{rssm_forward.1} parent=11 // pred_check
          %p561 = pneg %p264
        $region34: #{rssm_forward.1} parent=11 // pred_check_branch
          %563 = sbr.rel (%p561) target = $region36
        $region35: #{rssm_forward.1} parent=11 // pred_region
          _
        $region36: #{rssm_forward.1} parent=11 // pred_fallthru
          _
        // Predicated region
        $region37: #{rssm_forward.1} parent=11 // pred_check
          %p564 = pneg %p285
        $region38: #{rssm_forward.1} parent=11 // pred_check_branch
          %566 = sbr.rel (%p564) target = $region40
        $region39: #{rssm_forward.1} parent=11 // pred_region
          _
        $region40: #{rssm_forward.1} parent=11 // pred_fallthru
          _
        // Predicated region
        $region41: #{rssm_forward.1} parent=11 // pred_check
          %p567 = pneg %p306
        $region42: #{rssm_forward.1} parent=11 // pred_check_branch
          %569 = sbr.rel (%p567) target = $region44
        $region43: #{rssm_forward.1} parent=11 // pred_region
          _
        $region44: #{rssm_forward.1} parent=11 // pred_fallthru
          _
        // Predicated region
        $region45: #{rssm_forward.1} parent=11 // pred_check
          %p570 = pneg %p327
        $region46: #{rssm_forward.1} parent=11 // pred_check_branch
          %572 = sbr.rel (%p570) target = $region48
        $region47: #{rssm_forward.1} parent=11 // pred_region
          _
        $region48: #{rssm_forward.1} parent=11 // pred_fallthru
          _
        // Predicated region
        $region49: #{rssm_forward.1} parent=11 // pred_check
          %p573 = pneg %p348
        $region50: #{rssm_forward.1} parent=11 // pred_check_branch
          %575 = sbr.rel (%p573) target = $region52
        $region51: #{rssm_forward.1} parent=11 // pred_region
          _
        $region52: #{rssm_forward.1} parent=11 // pred_fallthru
          _
        // Predicated region
        $region53: #{rssm_forward.1} parent=11 // pred_check
          %p576 = pneg %p369
        $region54: #{rssm_forward.1} parent=11 // pred_check_branch
          %578 = sbr.rel (%p576) target = $region56
        $region55: #{rssm_forward.1} parent=11 // pred_region
          _
        $region56: #{rssm_forward.1} parent=11 // pred_fallthru
          _
        // Predicated region
        $region57: #{rssm_forward.1} parent=11 // pred_check
          %p579 = pneg %p390
        $region58: #{rssm_forward.1} parent=11 // pred_check_branch
          %581 = sbr.rel (%p579) target = $region60
        $region59: #{rssm_forward.1} parent=11 // pred_region
          _
        $region60: #{rssm_forward.1} parent=11 // pred_fallthru
          _
        // Predicated region
        $region61: #{rssm_forward.1} parent=11 // pred_check
          %p582 = pneg %p411
        $region62: #{rssm_forward.1} parent=11 // pred_check_branch
          %584 = sbr.rel (%p582) target = $region64
        $region63: #{rssm_forward.1} parent=11 // pred_region
          _
        $region64: #{rssm_forward.1} parent=11 // pred_fallthru
          _
        // Predicated region
        $region65: #{rssm_forward.1} parent=11 // pred_check
          %p585 = pneg %p432
        $region66: #{rssm_forward.1} parent=11 // pred_check_branch
          %587 = sbr.rel (%p585) target = $region68
        $region67: #{rssm_forward.1} parent=11 // pred_region
          _
        $region68: #{rssm_forward.1} parent=11 // pred_fallthru
          _
        // Predicated region
        $region69: #{rssm_forward.1} parent=11 // pred_check
          %p588 = pneg %p453
        $region70: #{rssm_forward.1} parent=11 // pred_check_branch
          %590 = sbr.rel (%p588) target = $region72
        $region71: #{rssm_forward.1} parent=11 // pred_region
          _
        $region72: #{rssm_forward.1} parent=11 // pred_fallthru
          _
      $region12: #{rssm_forward.1} parent=5 // pred_fallthru
        _
      %p591 = scmp.lt.s32.totalorder %s34, 8
      // Predicated region
      $region73: #{rssm_forward.1} parent=5 // pred_check
        %p592 = pneg %p591
      $region74: #{rssm_forward.1} parent=5 // pred_check_branch
        %594 = sbr.rel (%p592) target = $region76
      $region75: #{rssm_forward.1} parent=5 // pred_region
        // Predicated region
        $region77: #{rssm_forward.1} parent=75 // pred_check
          %p595 = pneg %p54
        $region78: #{rssm_forward.1} parent=75 // pred_check_branch
          %597 = sbr.rel (%p595) target = $region80
        $region79: #{rssm_forward.1} parent=75 // pred_region
          %p598 = scmp.lt.s32.totalorder %s34, 7
          %s599 = scalar_select %p598, %s34, 7
          %s600 = smul.addr %s599, 8
          %s601 = scalar_lea.vmem %s0, %s600
        $region80: #{rssm_forward.1} parent=75 // pred_fallthru
          _
        // Predicated region
        $region81: #{rssm_forward.1} parent=75 // pred_check
          %p602 = pneg %p80
        $region82: #{rssm_forward.1} parent=75 // pred_check_branch
          %604 = sbr.rel (%p602) target = $region84
        $region83: #{rssm_forward.1} parent=75 // pred_region
          %p605 = scmp.lt.s32.totalorder %s34, 7
          %s606 = scalar_select %p605, %s34, 7
          %s607 = smul.addr %s606, 8
          %s608 = scalar_lea.vmem %s1, %s607
        $region84: #{rssm_forward.1} parent=75 // pred_fallthru
          _
        // Predicated region
        $region85: #{rssm_forward.1} parent=75 // pred_check
          %p609 = pneg %p106
        $region86: #{rssm_forward.1} parent=75 // pred_check_branch
          %611 = sbr.rel (%p609) target = $region88
        $region87: #{rssm_forward.1} parent=75 // pred_region
          %p612 = scmp.lt.s32.totalorder %s34, 7
          %s613 = scalar_select %p612, %s34, 7
          %s614 = smul.addr %s613, 8
          %s615 = scalar_lea.vmem %s2, %s614
        $region88: #{rssm_forward.1} parent=75 // pred_fallthru
          _
        // Predicated region
        $region89: #{rssm_forward.1} parent=75 // pred_check
          %p616 = pneg %p132
        $region90: #{rssm_forward.1} parent=75 // pred_check_branch
          %618 = sbr.rel (%p616) target = $region92
        $region91: #{rssm_forward.1} parent=75 // pred_region
          %p619 = scmp.lt.s32.totalorder %s34, 7
          %s620 = scalar_select %p619, %s34, 7
          %s621 = smul.addr %s620, 8
          %s622 = scalar_lea.vmem %s3, %s621
        $region92: #{rssm_forward.1} parent=75 // pred_fallthru
          _
      $region76: #{rssm_forward.1} parent=5 // pred_fallthru
        _
      %p623 = scmp.le.s32.totalorder 1, %s34
      %p624 = scmp.lt.s32.totalorder %s34, 9
      %p625 = pnand %p623, %p624
      %p626 = pneg %p625
      // Predicated region
      $region93: #{rssm_forward.1} parent=5 // pred_check
        _
      $region94: #{rssm_forward.1} parent=5 // pred_check_branch
        %628 = sbr.rel (%p625) target = $region96
      $region95: #{rssm_forward.1} parent=5 // pred_region
        %s629 = ssub.s32 %s34, 1
        %p630 = scmp.lt.s32.totalorder %s39, 7
        %s631 = scalar_select %p630, %s39, 7
        %s632 = smul.addr %s631, 8
        %s633 = scalar_lea.vmem %s0, %s632
        %p634 = pneg %p60
        %p635 = pneg %p57
        %p636 = scmp.lt.s32.totalorder %s39, 7
        %s637 = scalar_select %p636, %s39, 7
        %s638 = smul.addr %s637, 8
        %s639 = scalar_lea.vmem %s1, %s638
        %p640 = pneg %p86
        %p641 = pneg %p83
        %p642 = scmp.lt.s32.totalorder %s39, 7
        %s643 = scalar_select %p642, %s39, 7
        %s644 = smul.addr %s643, 8
        %s645 = scalar_lea.vmem %s2, %s644
        %p646 = pneg %p112
        %p647 = pneg %p109
        %p648 = scmp.lt.s32.totalorder %s39, 7
        %s649 = scalar_select %p648, %s39, 7
        %s650 = smul.addr %s649, 8
        %s651 = scalar_lea.vmem %s3, %s650
        %p652 = pneg %p138
        %p653 = pneg %p135
        %p654 = pneg %p159
        %p655 = pneg %p156
        %p656 = pneg %p180
        %p657 = pneg %p177
        %p658 = pneg %p201
        %p659 = pneg %p198
        %p660 = pneg %p222
        %p661 = pneg %p219
        %p662 = pneg %p243
        %p663 = pneg %p240
        %p664 = pneg %p264
        %p665 = pneg %p261
        %p666 = pneg %p285
        %p667 = pneg %p282
        %p668 = pneg %p306
        %p669 = pneg %p303
        %p670 = pneg %p327
        %p671 = pneg %p324
        %p672 = pneg %p348
        %p673 = pneg %p345
        %p674 = pneg %p369
        %p675 = pneg %p366
        %p676 = pneg %p390
        %p677 = pneg %p387
        %p678 = pneg %p411
        %p679 = pneg %p408
        %p680 = pneg %p432
        %p681 = pneg %p429
        %p682 = pneg %p453
        %p683 = pneg %p450
        %p684 = pneg %p479
        %p685 = pneg %p476
        %s686 = sand.u32 %s466, 1
        %s687 = scalar_lea.sflag [#allocation6], %s686
        %s688 = sand.u32 %s466, 1
        %s689 = smul.addr %s688, 8
        %s690 = scalar_lea.vmem [#allocation5], %s689
        %p691 = pneg %p505
        %p692 = pneg %p502
        %s693 = sand.u32 %s39, 1
        %s694 = scalar_lea.sflag [#allocation8], %s693
        %s695 = sand.u32 %s492, 1
        %s696 = smul.addr %s695, 8
        %s697 = scalar_lea.vmem [#allocation7], %s696
        %p698 = pneg %p531
        %p699 = pneg %p528
        %s700 = sand.u32 %s39, 1
        %s701 = scalar_lea.sflag [#allocation8], %s700
        %s702 = sand.u32 %s518, 1
        %s703 = smul.addr %s702, 8
        %s704 = scalar_lea.vmem [#allocation9], %s703
        %p705 = scmp.lt.s32.totalorder %s39, 7
        %s706 = scalar_select %p705, %s39, 7
        %s707 = smul.addr %s706, 8
        %s708 = scalar_lea.vmem %s0, %s707
        %p709 = scmp.lt.s32.totalorder %s39, 7
        %s710 = scalar_select %p709, %s39, 7
        %s711 = smul.addr %s710, 8
        %s712 = scalar_lea.vmem %s1, %s711
        %p713 = scmp.lt.s32.totalorder %s39, 7
        %s714 = scalar_select %p713, %s39, 7
        %s715 = smul.addr %s714, 8
        %s716 = scalar_lea.vmem %s2, %s715
        %p717 = scmp.lt.s32.totalorder %s39, 7
        %s718 = scalar_select %p717, %s39, 7
        %s719 = smul.addr %s718, 8
        %s720 = scalar_lea.vmem %s3, %s719
        %p721 = scmp.eq.s32.totalorder %s39, 0
        // Predicated region
        $region97: #{rssm_forward.1} parent=95 // pred_check
          %p722 = pneg %p721
        $region98: #{rssm_forward.1} parent=95 // pred_check_branch
          %724 = sbr.rel (%p722) target = $region100
        $region99: #{rssm_forward.1} parent=95 // pred_region
          %v725 = vld [vmem:[%s4] sm:$0xff]
          %726 = vst [vmem:[#allocation2] sm:$0xff] %v725
        $region100: #{rssm_forward.1} parent=95 // pred_fallthru
          _
        %v727 = vld [vmem:[%s720] sm:$0xff]
        %v728 = vld [vmem:[%s708] sm:$0xff]
        %v729 = vmul.f32 %v728, %v727
        %730 = vst [vmem:[#allocation3] sm:$0xff] %v729
        %v731 = vld [vmem:[%s712] sm:$0xff]
        %732 = vst [vmem:[#allocation3 + $0x8] sm:$0xff] %v731
        %v733 = vld [vmem:[#allocation3] sm:$0xff]
        %v734 = vld [vmem:[#allocation3 + $0x8] sm:$0xff]
        %v735 = vld [vmem:[%s5] sm:$0xff]
        %v736 = vld [vmem:[%s5 + $0x8] sm:$0xff]
        %v737 = vld [vmem:[%s5 + $0x10] sm:$0xff]
        %v738 = vld [vmem:[%s5 + $0x18] sm:$0xff]
        %v739 = vld [vmem:[%s5 + $0x20] sm:$0xff]
        %v740 = vld [vmem:[%s5 + $0x28] sm:$0xff]
        %v741 = vld [vmem:[%s5 + $0x30] sm:$0xff]
        %v742 = vld [vmem:[%s5 + $0x38] sm:$0xff]
        %v743 = vld [vmem:[%s5 + $0x40] sm:$0xff]
        %v744 = vld [vmem:[%s5 + $0x48] sm:$0xff]
        %v745 = vld [vmem:[%s5 + $0x50] sm:$0xff]
        %v746 = vld [vmem:[%s5 + $0x58] sm:$0xff]
        %v747 = vld [vmem:[%s5 + $0x60] sm:$0xff]
        %v748 = vld [vmem:[%s5 + $0x68] sm:$0xff]
        %v749 = vld [vmem:[%s5 + $0x70] sm:$0xff]
        %v750 = vld [vmem:[%s5 + $0x78] sm:$0xff]
        %v751 = vld [vmem:[%s5 + $0x80] sm:$0xff]
        %v752 = vld [vmem:[%s5 + $0x88] sm:$0xff]
        %v753 = vld [vmem:[%s5 + $0x90] sm:$0xff]
        %v754 = vld [vmem:[%s5 + $0x98] sm:$0xff]
        %v755 = vld [vmem:[%s5 + $0xa0] sm:$0xff]
        %v756 = vld [vmem:[%s5 + $0xa8] sm:$0xff]
        %v757 = vld [vmem:[%s5 + $0xb0] sm:$0xff]
        %v758 = vld [vmem:[%s5 + $0xb8] sm:$0xff]
        %v759 = vld [vmem:[%s5 + $0xc0] sm:$0xff]
        %v760 = vld [vmem:[%s5 + $0xc8] sm:$0xff]
        %v761 = vld [vmem:[%s5 + $0xd0] sm:$0xff]
        %v762 = vld [vmem:[%s5 + $0xd8] sm:$0xff]
        %v763 = vld [vmem:[%s5 + $0xe0] sm:$0xff]
        %v764 = vld [vmem:[%s5 + $0xe8] sm:$0xff]
        %v765 = vld [vmem:[%s5 + $0xf0] sm:$0xff]
        %v766 = vld [vmem:[%s5 + $0xf8] sm:$0xff]
        %v767 = vld [vmem:[%s6] sm:$0x1]
        %v769 = vlaneseq
        %v770 = vshrl.u32 %v769, 7
        %v771 = vsub.s32 0, %v770
        %v772 = vrot.slane %v767, %v771
        %774 = vmatprep.subr.mxu0 0.0
        %775 = vmatpush1.msra.mxu0 %v735
        %776 = vmatprep.subr.mxu0 0.0
        %777 = vmatpush1.msra.mxu0 %v736
        %778 = vmatprep.subr.mxu0 0.0
        %779 = vmatpush1.msra.mxu0 %v737
        %780 = vmatprep.subr.mxu0 0.0
        %781 = vmatpush1.msra.mxu0 %v738
        %782 = vmatprep.subr.mxu0 0.0
        %783 = vmatpush1.msra.mxu0 %v739
        %784 = vmatprep.subr.mxu0 0.0
        %785 = vmatpush1.msra.mxu0 %v740
        %786 = vmatprep.subr.mxu0 0.0
        %787 = vmatpush1.msra.mxu0 %v741
        %788 = vmatprep.subr.mxu0 0.0
        %789 = vmatpush1.msra.mxu0 %v742
        %790 = vmatprep.subr.mxu0 0.0
        %791 = vmatpush1.msra.mxu0 %v743
        %792 = vmatprep.subr.mxu0 0.0
        %793 = vmatpush1.msra.mxu0 %v744
        %794 = vmatprep.subr.mxu0 0.0
        %795 = vmatpush1.msra.mxu0 %v745
        %796 = vmatprep.subr.mxu0 0.0
        %797 = vmatpush1.msra.mxu0 %v746
        %798 = vmatprep.subr.mxu0 0.0
        %799 = vmatpush1.msra.mxu0 %v747
        %800 = vmatprep.subr.mxu0 0.0
        %801 = vmatpush1.msra.mxu0 %v748
        %802 = vmatprep.subr.mxu0 0.0
        %803 = vmatpush1.msra.mxu0 %v749
        %804 = vmatprep.subr.mxu0 0.0
        %805 = vmatpush1.msra.mxu0 %v750
        %806 = vmatprep.subr.mxu0 0.0
        %807 = vmatpush1.msra.mxu0 %v751
        %808 = vmatprep.subr.mxu0 0.0
        %809 = vmatpush1.msra.mxu0 %v752
        %810 = vmatprep.subr.mxu0 0.0
        %811 = vmatpush1.msra.mxu0 %v753
        %812 = vmatprep.subr.mxu0 0.0
        %813 = vmatpush1.msra.mxu0 %v754
        %814 = vmatprep.subr.mxu0 0.0
        %815 = vmatpush1.msra.mxu0 %v755
        %816 = vmatprep.subr.mxu0 0.0
        %817 = vmatpush1.msra.mxu0 %v756
        %818 = vmatprep.subr.mxu0 0.0
        %819 = vmatpush1.msra.mxu0 %v757
        %820 = vmatprep.subr.mxu0 0.0
        %821 = vmatpush1.msra.mxu0 %v758
        %822 = vmatprep.subr.mxu0 0.0
        %823 = vmatpush1.msra.mxu0 %v759
        %824 = vmatprep.subr.mxu0 0.0
        %825 = vmatpush1.msra.mxu0 %v760
        %826 = vmatprep.subr.mxu0 0.0
        %827 = vmatpush1.msra.mxu0 %v761
        %828 = vmatprep.subr.mxu0 0.0
        %829 = vmatpush1.msra.mxu0 %v762
        %830 = vmatprep.subr.mxu0 0.0
        %831 = vmatpush1.msra.mxu0 %v763
        %832 = vmatprep.subr.mxu0 0.0
        %833 = vmatpush1.msra.mxu0 %v764
        %834 = vmatprep.subr.mxu0 0.0
        %835 = vmatpush1.msra.mxu0 %v765
        %836 = vmatprep.subr.mxu0 0.0
        %837 = vmatpush1.msra.mxu0 %v766
        %838 = vmatprep.mubr.f32.mxu0 %v734
        %839 = vmatmul.mubr.f32.gmra.mrb[0].mxu0 %v733
        %v840 = vpop.f32.mrb[0].mxu0
        %v841 = vadd.f32 %v772, %v840
        %v842 = vpop.f32.mrb[0].mxu0
        %843 = vdwg.mxu0
        %vm844 = vcmp.gt.f32.partialorder %v841, 0.0
        %v845 = vmin.f32 %v841, 0.0
        %v846 = vmul.f32 %v845, 1.442695
        %v847 = vpow.pop %v846
        %v848 = vsub.f32 %v847, 1.0
        %v849 = vsel %vm844, %v841, %v848
        %v850 = vld [vmem:[#allocation2] sm:$0xff]
        %v851 = vmul.f32 %v850, %v727
        %v852 = vld [vmem:[%s7] sm:$0xff]
        %v853 = vld [vmem:[%s7 + $0x8] sm:$0xff]
        %v854 = vld [vmem:[%s7 + $0x10] sm:$0xff]
        %v855 = vld [vmem:[%s7 + $0x18] sm:$0xff]
        %v856 = vld [vmem:[%s7 + $0x20] sm:$0xff]
        %v857 = vld [vmem:[%s7 + $0x28] sm:$0xff]
        %v858 = vld [vmem:[%s7 + $0x30] sm:$0xff]
        %v859 = vld [vmem:[%s7 + $0x38] sm:$0xff]
        %v860 = vld [vmem:[%s7 + $0x40] sm:$0xff]
        %v861 = vld [vmem:[%s7 + $0x48] sm:$0xff]
        %v862 = vld [vmem:[%s7 + $0x50] sm:$0xff]
        %v863 = vld [vmem:[%s7 + $0x58] sm:$0xff]
        %v864 = vld [vmem:[%s7 + $0x60] sm:$0xff]
        %v865 = vld [vmem:[%s7 + $0x68] sm:$0xff]
        %v866 = vld [vmem:[%s7 + $0x70] sm:$0xff]
        %v867 = vld [vmem:[%s7 + $0x78] sm:$0xff]
        %v868 = vld [vmem:[%s7 + $0x80] sm:$0xff]
        %v869 = vld [vmem:[%s7 + $0x88] sm:$0xff]
        %v870 = vld [vmem:[%s7 + $0x90] sm:$0xff]
        %v871 = vld [vmem:[%s7 + $0x98] sm:$0xff]
        %v872 = vld [vmem:[%s7 + $0xa0] sm:$0xff]
        %v873 = vld [vmem:[%s7 + $0xa8] sm:$0xff]
        %v874 = vld [vmem:[%s7 + $0xb0] sm:$0xff]
        %v875 = vld [vmem:[%s7 + $0xb8] sm:$0xff]
        %v876 = vld [vmem:[%s7 + $0xc0] sm:$0xff]
        %v877 = vld [vmem:[%s7 + $0xc8] sm:$0xff]
        %v878 = vld [vmem:[%s7 + $0xd0] sm:$0xff]
        %v879 = vld [vmem:[%s7 + $0xd8] sm:$0xff]
        %v880 = vld [vmem:[%s7 + $0xe0] sm:$0xff]
        %v881 = vld [vmem:[%s7 + $0xe8] sm:$0xff]
        %v882 = vld [vmem:[%s7 + $0xf0] sm:$0xff]
        %v883 = vld [vmem:[%s7 + $0xf8] sm:$0xff]
        %v884 = vld [vmem:[%s7 + $0x100] sm:$0xff]
        %v885 = vld [vmem:[%s7 + $0x108] sm:$0xff]
        %v886 = vld [vmem:[%s7 + $0x110] sm:$0xff]
        %v887 = vld [vmem:[%s7 + $0x118] sm:$0xff]
        %v888 = vld [vmem:[%s7 + $0x120] sm:$0xff]
        %v889 = vld [vmem:[%s7 + $0x128] sm:$0xff]
        %v890 = vld [vmem:[%s7 + $0x130] sm:$0xff]
        %v891 = vld [vmem:[%s7 + $0x138] sm:$0xff]
        %v892 = vld [vmem:[%s7 + $0x140] sm:$0xff]
        %v893 = vld [vmem:[%s7 + $0x148] sm:$0xff]
        %v894 = vld [vmem:[%s7 + $0x150] sm:$0xff]
        %v895 = vld [vmem:[%s7 + $0x158] sm:$0xff]
        %v896 = vld [vmem:[%s7 + $0x160] sm:$0xff]
        %v897 = vld [vmem:[%s7 + $0x168] sm:$0xff]
        %v898 = vld [vmem:[%s7 + $0x170] sm:$0xff]
        %v899 = vld [vmem:[%s7 + $0x178] sm:$0xff]
        %v900 = vld [vmem:[%s8] sm:$0x7]
        %v902 = vlaneseq
        %v903 = vshrl.u32 %v902, 7
        %v904 = vsub.s32 0, %v903
        %v905 = vrot.slane %v900, %v904
        %v906 = vlaneseq
        %v907 = vshrl.u32 %v906, 7
        %v908 = vsub.s32 1, %v907
        %v909 = vrot.slane %v900, %v908
        %v910 = vlaneseq
        %v911 = vshrl.u32 %v910, 7
        %v912 = vsub.s32 2, %v911
        %v913 = vrot.slane %v900, %v912
        %917 = vmatprep.subr.mxu0 %v853
        %918 = vmatpush1.msra.mxu0 %v852
        %919 = vmatprep.subr.mxu0 %v856
        %920 = vmatpush1.msra.mxu0 %v855
        %921 = vmatprep.subr.mxu0 %v859
        %922 = vmatpush1.msra.mxu0 %v858
        %923 = vmatprep.subr.mxu0 %v862
        %924 = vmatpush1.msra.mxu0 %v861
        %925 = vmatprep.subr.mxu0 %v865
        %926 = vmatpush1.msra.mxu0 %v864
        %927 = vmatprep.subr.mxu0 %v868
        %928 = vmatpush1.msra.mxu0 %v867
        %929 = vmatprep.subr.mxu0 %v871
        %930 = vmatpush1.msra.mxu0 %v870
        %931 = vmatprep.subr.mxu0 %v874
        %932 = vmatpush1.msra.mxu0 %v873
        %933 = vmatprep.subr.mxu0 %v877
        %934 = vmatpush1.msra.mxu0 %v876
        %935 = vmatprep.subr.mxu0 %v880
        %936 = vmatpush1.msra.mxu0 %v879
        %937 = vmatprep.subr.mxu0 %v883
        %938 = vmatpush1.msra.mxu0 %v882
        %939 = vmatprep.subr.mxu0 %v886
        %940 = vmatpush1.msra.mxu0 %v885
        %941 = vmatprep.subr.mxu0 %v889
        %942 = vmatpush1.msra.mxu0 %v888
        %943 = vmatprep.subr.mxu0 %v892
        %944 = vmatpush1.msra.mxu0 %v891
        %945 = vmatprep.subr.mxu0 %v895
        %946 = vmatpush1.msra.mxu0 %v894
        %947 = vmatprep.subr.mxu0 %v898
        %948 = vmatpush1.msra.mxu0 %v897
        %949 = vmatprep.subr.mxu0 0.0
        %950 = vmatpush1.msra.mxu0 0.0
        %951 = vmatprep.subr.mxu0 0.0
        %952 = vmatpush1.msra.mxu0 0.0
        %953 = vmatprep.subr.mxu0 0.0
        %954 = vmatpush1.msra.mxu0 0.0
        %955 = vmatprep.subr.mxu0 0.0
        %956 = vmatpush1.msra.mxu0 0.0
        %957 = vmatprep.subr.mxu0 0.0
        %958 = vmatpush1.msra.mxu0 0.0
        %959 = vmatprep.subr.mxu0 0.0
        %960 = vmatpush1.msra.mxu0 0.0
        %961 = vmatprep.subr.mxu0 0.0
        %962 = vmatpush1.msra.mxu0 0.0
        %963 = vmatprep.subr.mxu0 0.0
        %964 = vmatpush1.msra.mxu0 0.0
        %965 = vmatprep.subr.mxu0 0.0
        %966 = vmatpush1.msra.mxu0 0.0
        %967 = vmatprep.subr.mxu0 0.0
        %968 = vmatpush1.msra.mxu0 0.0
        %969 = vmatprep.subr.mxu0 0.0
        %970 = vmatpush1.msra.mxu0 0.0
        %971 = vmatprep.subr.mxu0 0.0
        %972 = vmatpush1.msra.mxu0 0.0
        %973 = vmatprep.subr.mxu0 0.0
        %974 = vmatpush1.msra.mxu0 0.0
        %975 = vmatprep.subr.mxu0 0.0
        %976 = vmatpush1.msra.mxu0 0.0
        %977 = vmatprep.subr.mxu0 0.0
        %978 = vmatpush1.msra.mxu0 0.0
        %979 = vmatprep.subr.mxu0 0.0
        %980 = vmatpush1.msra.mxu0 0.0
        %981 = vmatprep.mubr.f32.mxu0 0.0
        %982 = vmatmul.mubr.f32.gmra.mrb[0].mxu0 %v849
        %v983 = vpop.f32.mrb[0].mxu0
        %v984 = vadd.f32 %v905, %v983
        %v985 = vpop.f32.mrb[0].mxu0
        %v986 = vadd.f32 %v909, %v985
        %987 = vdwg.mxu0
        %988 = vmatprep.subr.mxu0 0.0
        %989 = vmatpush1.msra.mxu0 %v854
        %990 = vmatprep.subr.mxu0 0.0
        %991 = vmatpush1.msra.mxu0 %v857
        %992 = vmatprep.subr.mxu0 0.0
        %993 = vmatpush1.msra.mxu0 %v860
        %994 = vmatprep.subr.mxu0 0.0
        %995 = vmatpush1.msra.mxu0 %v863
        %996 = vmatprep.subr.mxu0 0.0
        %997 = vmatpush1.msra.mxu0 %v866
        %998 = vmatprep.subr.mxu0 0.0
        %999 = vmatpush1.msra.mxu0 %v869
        %1000 = vmatprep.subr.mxu0 0.0
        %1001 = vmatpush1.msra.mxu0 %v872
        %1002 = vmatprep.subr.mxu0 0.0
        %1003 = vmatpush1.msra.mxu0 %v875
        %1004 = vmatprep.subr.mxu0 0.0
        %1005 = vmatpush1.msra.mxu0 %v878
        %1006 = vmatprep.subr.mxu0 0.0
        %1007 = vmatpush1.msra.mxu0 %v881
        %1008 = vmatprep.subr.mxu0 0.0
        %1009 = vmatpush1.msra.mxu0 %v884
        %1010 = vmatprep.subr.mxu0 0.0
        %1011 = vmatpush1.msra.mxu0 %v887
        %1012 = vmatprep.subr.mxu0 0.0
        %1013 = vmatpush1.msra.mxu0 %v890
        %1014 = vmatprep.subr.mxu0 0.0
        %1015 = vmatpush1.msra.mxu0 %v893
        %1016 = vmatprep.subr.mxu0 0.0
        %1017 = vmatpush1.msra.mxu0 %v896
        %1018 = vmatprep.subr.mxu0 0.0
        %1019 = vmatpush1.msra.mxu0 %v899
        %1020 = vmatprep.subr.mxu0 0.0
        %1021 = vmatpush1.msra.mxu0 0.0
        %1022 = vmatprep.subr.mxu0 0.0
        %1023 = vmatpush1.msra.mxu0 0.0
        %1024 = vmatprep.subr.mxu0 0.0
        %1025 = vmatpush1.msra.mxu0 0.0
        %1026 = vmatprep.subr.mxu0 0.0
        %1027 = vmatpush1.msra.mxu0 0.0
        %1028 = vmatprep.subr.mxu0 0.0
        %1029 = vmatpush1.msra.mxu0 0.0
        %1030 = vmatprep.subr.mxu0 0.0
        %1031 = vmatpush1.msra.mxu0 0.0
        %1032 = vmatprep.subr.mxu0 0.0
        %1033 = vmatpush1.msra.mxu0 0.0
        %1034 = vmatprep.subr.mxu0 0.0
        %1035 = vmatpush1.msra.mxu0 0.0
        %1036 = vmatprep.subr.mxu0 0.0
        %1037 = vmatpush1.msra.mxu0 0.0
        %1038 = vmatprep.subr.mxu0 0.0
        %1039 = vmatpush1.msra.mxu0 0.0
        %1040 = vmatprep.subr.mxu0 0.0
        %1041 = vmatpush1.msra.mxu0 0.0
        %1042 = vmatprep.subr.mxu0 0.0
        %1043 = vmatpush1.msra.mxu0 0.0
        %1044 = vmatprep.subr.mxu0 0.0
        %1045 = vmatpush1.msra.mxu0 0.0
        %1046 = vmatprep.subr.mxu0 0.0
        %1047 = vmatpush1.msra.mxu0 0.0
        %1048 = vmatprep.subr.mxu0 0.0
        %1049 = vmatpush1.msra.mxu0 0.0
        %1050 = vmatprep.subr.mxu0 0.0
        %1051 = vmatpush1.msra.mxu0 0.0
        %1052 = vmatprep.mubr.f32.mxu0 0.0
        %1053 = vmatmul.mubr.f32.gmra.mrb[0].mxu0 %v849
        %v1054 = vpop.f32.mrb[0].mxu0
        %v1055 = vadd.f32 %v913, %v1054
        %v1056 = vpop.f32.mrb[0].mxu0
        %1057 = vdwg.mxu0
        %v1058 = vld [vmem:[%s9] sm:$0xff]
        %v1059 = vld [vmem:[%s9 + $0x8] sm:$0xff]
        %v1060 = vld [vmem:[%s9 + $0x10] sm:$0xff]
        %v1061 = vld [vmem:[%s9 + $0x18] sm:$0xff]
        %v1062 = vld [vmem:[%s9 + $0x20] sm:$0xff]
        %v1063 = vld [vmem:[%s9 + $0x28] sm:$0xff]
        %v1064 = vld [vmem:[%s9 + $0x30] sm:$0xff]
        %v1065 = vld [vmem:[%s9 + $0x38] sm:$0xff]
        %v1066 = vld [vmem:[%s9 + $0x40] sm:$0xff]
        %v1067 = vld [vmem:[%s9 + $0x48] sm:$0xff]
        %v1068 = vld [vmem:[%s9 + $0x50] sm:$0xff]
        %v1069 = vld [vmem:[%s9 + $0x58] sm:$0xff]
        %v1070 = vld [vmem:[%s9 + $0x60] sm:$0xff]
        %v1071 = vld [vmem:[%s9 + $0x68] sm:$0xff]
        %v1072 = vld [vmem:[%s9 + $0x70] sm:$0xff]
        %v1073 = vld [vmem:[%s9 + $0x78] sm:$0xff]
        %v1074 = vld [vmem:[%s9 + $0x80] sm:$0xff]
        %v1075 = vld [vmem:[%s9 + $0x88] sm:$0xff]
        %v1076 = vld [vmem:[%s9 + $0x90] sm:$0xff]
        %v1077 = vld [vmem:[%s9 + $0x98] sm:$0xff]
        %v1078 = vld [vmem:[%s9 + $0xa0] sm:$0xff]
        %v1079 = vld [vmem:[%s9 + $0xa8] sm:$0xff]
        %v1080 = vld [vmem:[%s9 + $0xb0] sm:$0xff]
        %v1081 = vld [vmem:[%s9 + $0xb8] sm:$0xff]
        %v1082 = vld [vmem:[%s9 + $0xc0] sm:$0xff]
        %v1083 = vld [vmem:[%s9 + $0xc8] sm:$0xff]
        %v1084 = vld [vmem:[%s9 + $0xd0] sm:$0xff]
        %v1085 = vld [vmem:[%s9 + $0xd8] sm:$0xff]
        %v1086 = vld [vmem:[%s9 + $0xe0] sm:$0xff]
        %v1087 = vld [vmem:[%s9 + $0xe8] sm:$0xff]
        %v1088 = vld [vmem:[%s9 + $0xf0] sm:$0xff]
        %v1089 = vld [vmem:[%s9 + $0xf8] sm:$0xff]
        %v1090 = vld [vmem:[%s9 + $0x100] sm:$0xff]
        %v1091 = vld [vmem:[%s9 + $0x108] sm:$0xff]
        %v1092 = vld [vmem:[%s9 + $0x110] sm:$0xff]
        %v1093 = vld [vmem:[%s9 + $0x118] sm:$0xff]
        %v1094 = vld [vmem:[%s9 + $0x120] sm:$0xff]
        %v1095 = vld [vmem:[%s9 + $0x128] sm:$0xff]
        %v1096 = vld [vmem:[%s9 + $0x130] sm:$0xff]
        %v1097 = vld [vmem:[%s9 + $0x138] sm:$0xff]
        %v1098 = vld [vmem:[%s9 + $0x140] sm:$0xff]
        %v1099 = vld [vmem:[%s9 + $0x148] sm:$0xff]
        %v1100 = vld [vmem:[%s9 + $0x150] sm:$0xff]
        %v1101 = vld [vmem:[%s9 + $0x158] sm:$0xff]
        %v1102 = vld [vmem:[%s9 + $0x160] sm:$0xff]
        %v1103 = vld [vmem:[%s9 + $0x168] sm:$0xff]
        %v1104 = vld [vmem:[%s9 + $0x170] sm:$0xff]
        %v1105 = vld [vmem:[%s9 + $0x178] sm:$0xff]
        %v1106 = vld [vmem:[%s10] sm:$0x7]
        %v1108 = vlaneseq
        %v1109 = vshrl.u32 %v1108, 7
        %v1110 = vsub.s32 0, %v1109
        %v1111 = vrot.slane %v1106, %v1110
        %v1112 = vlaneseq
        %v1113 = vshrl.u32 %v1112, 7
        %v1114 = vsub.s32 1, %v1113
        %v1115 = vrot.slane %v1106, %v1114
        %v1116 = vlaneseq
        %v1117 = vshrl.u32 %v1116, 7
        %v1118 = vsub.s32 2, %v1117
        %v1119 = vrot.slane %v1106, %v1118
        %1123 = vmatprep.subr.mxu0 %v1059
        %1124 = vmatpush1.msra.mxu0 %v1058
        %1125 = vmatprep.subr.mxu0 %v1062
        %1126 = vmatpush1.msra.mxu0 %v1061
        %1127 = vmatprep.subr.mxu0 %v1065
        %1128 = vmatpush1.msra.mxu0 %v1064
        %1129 = vmatprep.subr.mxu0 %v1068
        %1130 = vmatpush1.msra.mxu0 %v1067
        %1131 = vmatprep.subr.mxu0 %v1071
        %1132 = vmatpush1.msra.mxu0 %v1070
        %1133 = vmatprep.subr.mxu0 %v1074
        %1134 = vmatpush1.msra.mxu0 %v1073
        %1135 = vmatprep.subr.mxu0 %v1077
        %1136 = vmatpush1.msra.mxu0 %v1076
        %1137 = vmatprep.subr.mxu0 %v1080
        %1138 = vmatpush1.msra.mxu0 %v1079
        %1139 = vmatprep.subr.mxu0 %v1083
        %1140 = vmatpush1.msra.mxu0 %v1082
        %1141 = vmatprep.subr.mxu0 %v1086
        %1142 = vmatpush1.msra.mxu0 %v1085
        %1143 = vmatprep.subr.mxu0 %v1089
        %1144 = vmatpush1.msra.mxu0 %v1088
        %1145 = vmatprep.subr.mxu0 %v1092
        %1146 = vmatpush1.msra.mxu0 %v1091
        %1147 = vmatprep.subr.mxu0 %v1095
        %1148 = vmatpush1.msra.mxu0 %v1094
        %1149 = vmatprep.subr.mxu0 %v1098
        %1150 = vmatpush1.msra.mxu0 %v1097
        %1151 = vmatprep.subr.mxu0 %v1101
        %1152 = vmatpush1.msra.mxu0 %v1100
        %1153 = vmatprep.subr.mxu0 %v1104
        %1154 = vmatpush1.msra.mxu0 %v1103
        %1155 = vmatprep.subr.mxu0 0.0
        %1156 = vmatpush1.msra.mxu0 0.0
        %1157 = vmatprep.subr.mxu0 0.0
        %1158 = vmatpush1.msra.mxu0 0.0
        %1159 = vmatprep.subr.mxu0 0.0
        %1160 = vmatpush1.msra.mxu0 0.0
        %1161 = vmatprep.subr.mxu0 0.0
        %1162 = vmatpush1.msra.mxu0 0.0
        %1163 = vmatprep.subr.mxu0 0.0
        %1164 = vmatpush1.msra.mxu0 0.0
        %1165 = vmatprep.subr.mxu0 0.0
        %1166 = vmatpush1.msra.mxu0 0.0
        %1167 = vmatprep.subr.mxu0 0.0
        %1168 = vmatpush1.msra.mxu0 0.0
        %1169 = vmatprep.subr.mxu0 0.0
        %1170 = vmatpush1.msra.mxu0 0.0
        %1171 = vmatprep.subr.mxu0 0.0
        %1172 = vmatpush1.msra.mxu0 0.0
        %1173 = vmatprep.subr.mxu0 0.0
        %1174 = vmatpush1.msra.mxu0 0.0
        %1175 = vmatprep.subr.mxu0 0.0
        %1176 = vmatpush1.msra.mxu0 0.0
        %1177 = vmatprep.subr.mxu0 0.0
        %1178 = vmatpush1.msra.mxu0 0.0
        %1179 = vmatprep.subr.mxu0 0.0
        %1180 = vmatpush1.msra.mxu0 0.0
        %1181 = vmatprep.subr.mxu0 0.0
        %1182 = vmatpush1.msra.mxu0 0.0
        %1183 = vmatprep.subr.mxu0 0.0
        %1184 = vmatpush1.msra.mxu0 0.0
        %1185 = vmatprep.subr.mxu0 0.0
        %1186 = vmatpush1.msra.mxu0 0.0
        %1187 = vmatprep.mubr.f32.mxu0 0.0
        %1188 = vmatmul.mubr.f32.gmra.mrb[0].mxu0 %v851
        %v1189 = vpop.f32.mrb[0].mxu0
        %v1190 = vadd.f32 %v1111, %v1189
        %v1191 = vpop.f32.mrb[0].mxu0
        %v1192 = vadd.f32 %v1115, %v1191
        %1193 = vdwg.mxu0
        %1194 = vmatprep.subr.mxu0 0.0
        %1195 = vmatpush1.msra.mxu0 %v1060
        %1196 = vmatprep.subr.mxu0 0.0
        %1197 = vmatpush1.msra.mxu0 %v1063
        %1198 = vmatprep.subr.mxu0 0.0
        %1199 = vmatpush1.msra.mxu0 %v1066
        %1200 = vmatprep.subr.mxu0 0.0
        %1201 = vmatpush1.msra.mxu0 %v1069
        %1202 = vmatprep.subr.mxu0 0.0
        %1203 = vmatpush1.msra.mxu0 %v1072
        %1204 = vmatprep.subr.mxu0 0.0
        %1205 = vmatpush1.msra.mxu0 %v1075
        %1206 = vmatprep.subr.mxu0 0.0
        %1207 = vmatpush1.msra.mxu0 %v1078
        %1208 = vmatprep.subr.mxu0 0.0
        %1209 = vmatpush1.msra.mxu0 %v1081
        %1210 = vmatprep.subr.mxu0 0.0
        %1211 = vmatpush1.msra.mxu0 %v1084
        %1212 = vmatprep.subr.mxu0 0.0
        %1213 = vmatpush1.msra.mxu0 %v1087
        %1214 = vmatprep.subr.mxu0 0.0
        %1215 = vmatpush1.msra.mxu0 %v1090
        %1216 = vmatprep.subr.mxu0 0.0
        %1217 = vmatpush1.msra.mxu0 %v1093
        %1218 = vmatprep.subr.mxu0 0.0
        %1219 = vmatpush1.msra.mxu0 %v1096
        %1220 = vmatprep.subr.mxu0 0.0
        %1221 = vmatpush1.msra.mxu0 %v1099
        %1222 = vmatprep.subr.mxu0 0.0
        %1223 = vmatpush1.msra.mxu0 %v1102
        %1224 = vmatprep.subr.mxu0 0.0
        %1225 = vmatpush1.msra.mxu0 %v1105
        %1226 = vmatprep.subr.mxu0 0.0
        %1227 = vmatpush1.msra.mxu0 0.0
        %1228 = vmatprep.subr.mxu0 0.0
        %1229 = vmatpush1.msra.mxu0 0.0
        %1230 = vmatprep.subr.mxu0 0.0
        %1231 = vmatpush1.msra.mxu0 0.0
        %1232 = vmatprep.subr.mxu0 0.0
        %1233 = vmatpush1.msra.mxu0 0.0
        %1234 = vmatprep.subr.mxu0 0.0
        %1235 = vmatpush1.msra.mxu0 0.0
        %1236 = vmatprep.subr.mxu0 0.0
        %1237 = vmatpush1.msra.mxu0 0.0
        %1238 = vmatprep.subr.mxu0 0.0
        %1239 = vmatpush1.msra.mxu0 0.0
        %1240 = vmatprep.subr.mxu0 0.0
        %1241 = vmatpush1.msra.mxu0 0.0
        %1242 = vmatprep.subr.mxu0 0.0
        %1243 = vmatpush1.msra.mxu0 0.0
        %1244 = vmatprep.subr.mxu0 0.0
        %1245 = vmatpush1.msra.mxu0 0.0
        %1246 = vmatprep.subr.mxu0 0.0
        %1247 = vmatpush1.msra.mxu0 0.0
        %1248 = vmatprep.subr.mxu0 0.0
        %1249 = vmatpush1.msra.mxu0 0.0
        %1250 = vmatprep.subr.mxu0 0.0
        %1251 = vmatpush1.msra.mxu0 0.0
        %1252 = vmatprep.subr.mxu0 0.0
        %1253 = vmatpush1.msra.mxu0 0.0
        %1254 = vmatprep.subr.mxu0 0.0
        %1255 = vmatpush1.msra.mxu0 0.0
        %1256 = vmatprep.subr.mxu0 0.0
        %1257 = vmatpush1.msra.mxu0 0.0
        %1258 = vmatprep.mubr.f32.mxu0 0.0
        %1259 = vmatmul.mubr.f32.gmra.mrb[0].mxu0 %v851
        %v1260 = vpop.f32.mrb[0].mxu0
        %v1261 = vadd.f32 %v1119, %v1260
        %v1262 = vpop.f32.mrb[0].mxu0
        %1263 = vdwg.mxu0
        %v1264 = vadd.f32 %v984, %v1190
        %v1265 = vsub.f32 0.0, %v1264
        %v1266 = vmul.f32 %v1265, 1.442695
        %v1267 = vpow.pop %v1266
        %v1268 = vadd.f32 %v1267, 1.0
        %v1269 = vrcp.pop %v1268
        %v1270 = vmul.f32 1.0, %v1269
        %v1271 = vadd.f32 %v986, %v1192
        %v1272 = vsub.f32 0.0, %v1271
        %v1273 = vmul.f32 %v1272, 1.442695
        %v1274 = vpow.pop %v1273
        %v1275 = vadd.f32 %v1274, 1.0
        %v1276 = vrcp.pop %v1275
        %v1277 = vmul.f32 1.0, %v1276
        %v1278 = vmul.f32 %v1270, %v1261
        %v1279 = vadd.f32 %v1055, %v1278
        %v1280 = vtanh.pop %v1279
        %v1281 = vsub.f32 1.0, %v1277
        %v1282 = vmul.f32 %v1281, %v1280
        %v1283 = vmul.f32 %v1277, %v851
        %v1284 = vadd.f32 %v1282, %v1283
        %1285 = vst [vmem:[#allocation2] sm:$0xff] %v1284
        %1286 = vst [vmem:[%s704] sm:$0xff] %v1284
        %v1287 = vld [vmem:[%s11] sm:$0xff]
        %v1288 = vld [vmem:[%s11 + $0x8] sm:$0xff]
        %v1289 = vld [vmem:[%s11 + $0x10] sm:$0xff]
        %v1290 = vld [vmem:[%s11 + $0x18] sm:$0xff]
        %v1291 = vld [vmem:[%s11 + $0x20] sm:$0xff]
        %v1292 = vld [vmem:[%s11 + $0x28] sm:$0xff]
        %v1293 = vld [vmem:[%s11 + $0x30] sm:$0xff]
        %v1294 = vld [vmem:[%s11 + $0x38] sm:$0xff]
        %v1295 = vld [vmem:[%s11 + $0x40] sm:$0xff]
        %v1296 = vld [vmem:[%s11 + $0x48] sm:$0xff]
        %v1297 = vld [vmem:[%s11 + $0x50] sm:$0xff]
        %v1298 = vld [vmem:[%s11 + $0x58] sm:$0xff]
        %v1299 = vld [vmem:[%s11 + $0x60] sm:$0xff]
        %v1300 = vld [vmem:[%s11 + $0x68] sm:$0xff]
        %v1301 = vld [vmem:[%s11 + $0x70] sm:$0xff]
        %v1302 = vld [vmem:[%s11 + $0x78] sm:$0xff]
        %v1303 = vld [vmem:[%s12] sm:$0x1]
        %v1305 = vlaneseq
        %v1306 = vshrl.u32 %v1305, 7
        %v1307 = vsub.s32 0, %v1306
        %v1308 = vrot.slane %v1303, %v1307
        %1310 = vmatprep.subr.mxu0 0.0
        %1311 = vmatpush1.msra.mxu0 %v1287
        %1312 = vmatprep.subr.mxu0 0.0
        %1313 = vmatpush1.msra.mxu0 %v1288
        %1314 = vmatprep.subr.mxu0 0.0
        %1315 = vmatpush1.msra.mxu0 %v1289
        %1316 = vmatprep.subr.mxu0 0.0
        %1317 = vmatpush1.msra.mxu0 %v1290
        %1318 = vmatprep.subr.mxu0 0.0
        %1319 = vmatpush1.msra.mxu0 %v1291
        %1320 = vmatprep.subr.mxu0 0.0
        %1321 = vmatpush1.msra.mxu0 %v1292
        %1322 = vmatprep.subr.mxu0 0.0
        %1323 = vmatpush1.msra.mxu0 %v1293
        %1324 = vmatprep.subr.mxu0 0.0
        %1325 = vmatpush1.msra.mxu0 %v1294
        %1326 = vmatprep.subr.mxu0 0.0
        %1327 = vmatpush1.msra.mxu0 %v1295
        %1328 = vmatprep.subr.mxu0 0.0
        %1329 = vmatpush1.msra.mxu0 %v1296
        %1330 = vmatprep.subr.mxu0 0.0
        %1331 = vmatpush1.msra.mxu0 %v1297
        %1332 = vmatprep.subr.mxu0 0.0
        %1333 = vmatpush1.msra.mxu0 %v1298
        %1334 = vmatprep.subr.mxu0 0.0
        %1335 = vmatpush1.msra.mxu0 %v1299
        %1336 = vmatprep.subr.mxu0 0.0
        %1337 = vmatpush1.msra.mxu0 %v1300
        %1338 = vmatprep.subr.mxu0 0.0
        %1339 = vmatpush1.msra.mxu0 %v1301
        %1340 = vmatprep.subr.mxu0 0.0
        %1341 = vmatpush1.msra.mxu0 %v1302
        %1342 = vmatprep.subr.mxu0 0.0
        %1343 = vmatpush1.msra.mxu0 0.0
        %1344 = vmatprep.subr.mxu0 0.0
        %1345 = vmatpush1.msra.mxu0 0.0
        %1346 = vmatprep.subr.mxu0 0.0
        %1347 = vmatpush1.msra.mxu0 0.0
        %1348 = vmatprep.subr.mxu0 0.0
        %1349 = vmatpush1.msra.mxu0 0.0
        %1350 = vmatprep.subr.mxu0 0.0
        %1351 = vmatpush1.msra.mxu0 0.0
        %1352 = vmatprep.subr.mxu0 0.0
        %1353 = vmatpush1.msra.mxu0 0.0
        %1354 = vmatprep.subr.mxu0 0.0
        %1355 = vmatpush1.msra.mxu0 0.0
        %1356 = vmatprep.subr.mxu0 0.0
        %1357 = vmatpush1.msra.mxu0 0.0
        %1358 = vmatprep.subr.mxu0 0.0
        %1359 = vmatpush1.msra.mxu0 0.0
        %1360 = vmatprep.subr.mxu0 0.0
        %1361 = vmatpush1.msra.mxu0 0.0
        %1362 = vmatprep.subr.mxu0 0.0
        %1363 = vmatpush1.msra.mxu0 0.0
        %1364 = vmatprep.subr.mxu0 0.0
        %1365 = vmatpush1.msra.mxu0 0.0
        %1366 = vmatprep.subr.mxu0 0.0
        %1367 = vmatpush1.msra.mxu0 0.0
        %1368 = vmatprep.subr.mxu0 0.0
        %1369 = vmatpush1.msra.mxu0 0.0
        %1370 = vmatprep.subr.mxu0 0.0
        %1371 = vmatpush1.msra.mxu0 0.0
        %1372 = vmatprep.subr.mxu0 0.0
        %1373 = vmatpush1.msra.mxu0 0.0
        %1374 = vmatprep.mubr.f32.mxu0 0.0
        %1375 = vmatmul.mubr.f32.gmra.mrb[0].mxu0 %v1284
        %v1376 = vpop.f32.mrb[0].mxu0
        %v1377 = vadd.f32 %v1308, %v1376
        %v1378 = vpop.f32.mrb[0].mxu0
        %1379 = vdwg.mxu0
        %vm1380 = vcmp.gt.f32.partialorder %v1377, 0.0
        %v1381 = vmin.f32 %v1377, 0.0
        %v1382 = vmul.f32 %v1381, 1.442695
        %v1383 = vpow.pop %v1382
        %v1384 = vsub.f32 %v1383, 1.0
        %v1385 = vsel %vm1380, %v1377, %v1384
        %v1386 = vld [vmem:[%s13] sm:$0xff]
        %v1387 = vld [vmem:[%s13 + $0x8] sm:$0xff]
        %v1388 = vld [vmem:[%s13 + $0x10] sm:$0xff]
        %v1389 = vld [vmem:[%s13 + $0x18] sm:$0xff]
        %v1390 = vld [vmem:[%s13 + $0x20] sm:$0xff]
        %v1391 = vld [vmem:[%s13 + $0x28] sm:$0xff]
        %v1392 = vld [vmem:[%s13 + $0x30] sm:$0xff]
        %v1393 = vld [vmem:[%s13 + $0x38] sm:$0xff]
        %v1394 = vld [vmem:[%s13 + $0x40] sm:$0xff]
        %v1395 = vld [vmem:[%s13 + $0x48] sm:$0xff]
        %v1396 = vld [vmem:[%s13 + $0x50] sm:$0xff]
        %v1397 = vld [vmem:[%s13 + $0x58] sm:$0xff]
        %v1398 = vld [vmem:[%s13 + $0x60] sm:$0xff]
        %v1399 = vld [vmem:[%s13 + $0x68] sm:$0xff]
        %v1400 = vld [vmem:[%s13 + $0x70] sm:$0xff]
        %v1401 = vld [vmem:[%s13 + $0x78] sm:$0xff]
        %v1402 = vld [vmem:[%s14] sm:$0x1]
        %v1404 = vlaneseq
        %v1405 = vshrl.u32 %v1404, 7
        %v1406 = vsub.s32 0, %v1405
        %v1407 = vrot.slane %v1402, %v1406
        %1409 = vmatprep.subr.mxu0 0.0
        %1410 = vmatpush1.msra.mxu0 %v1386
        %1411 = vmatprep.subr.mxu0 0.0
        %1412 = vmatpush1.msra.mxu0 %v1387
        %1413 = vmatprep.subr.mxu0 0.0
        %1414 = vmatpush1.msra.mxu0 %v1388
        %1415 = vmatprep.subr.mxu0 0.0
        %1416 = vmatpush1.msra.mxu0 %v1389
        %1417 = vmatprep.subr.mxu0 0.0
        %1418 = vmatpush1.msra.mxu0 %v1390
        %1419 = vmatprep.subr.mxu0 0.0
        %1420 = vmatpush1.msra.mxu0 %v1391
        %1421 = vmatprep.subr.mxu0 0.0
        %1422 = vmatpush1.msra.mxu0 %v1392
        %1423 = vmatprep.subr.mxu0 0.0
        %1424 = vmatpush1.msra.mxu0 %v1393
        %1425 = vmatprep.subr.mxu0 0.0
        %1426 = vmatpush1.msra.mxu0 %v1394
        %1427 = vmatprep.subr.mxu0 0.0
        %1428 = vmatpush1.msra.mxu0 %v1395
        %1429 = vmatprep.subr.mxu0 0.0
        %1430 = vmatpush1.msra.mxu0 %v1396
        %1431 = vmatprep.subr.mxu0 0.0
        %1432 = vmatpush1.msra.mxu0 %v1397
        %1433 = vmatprep.subr.mxu0 0.0
        %1434 = vmatpush1.msra.mxu0 %v1398
        %1435 = vmatprep.subr.mxu0 0.0
        %1436 = vmatpush1.msra.mxu0 %v1399
        %1437 = vmatprep.subr.mxu0 0.0
        %1438 = vmatpush1.msra.mxu0 %v1400
        %1439 = vmatprep.subr.mxu0 0.0
        %1440 = vmatpush1.msra.mxu0 %v1401
        %1441 = vmatprep.subr.mxu0 0.0
        %1442 = vmatpush1.msra.mxu0 0.0
        %1443 = vmatprep.subr.mxu0 0.0
        %1444 = vmatpush1.msra.mxu0 0.0
        %1445 = vmatprep.subr.mxu0 0.0
        %1446 = vmatpush1.msra.mxu0 0.0
        %1447 = vmatprep.subr.mxu0 0.0
        %1448 = vmatpush1.msra.mxu0 0.0
        %1449 = vmatprep.subr.mxu0 0.0
        %1450 = vmatpush1.msra.mxu0 0.0
        %1451 = vmatprep.subr.mxu0 0.0
        %1452 = vmatpush1.msra.mxu0 0.0
        %1453 = vmatprep.subr.mxu0 0.0
        %1454 = vmatpush1.msra.mxu0 0.0
        %1455 = vmatprep.subr.mxu0 0.0
        %1456 = vmatpush1.msra.mxu0 0.0
        %1457 = vmatprep.subr.mxu0 0.0
        %1458 = vmatpush1.msra.mxu0 0.0
        %1459 = vmatprep.subr.mxu0 0.0
        %1460 = vmatpush1.msra.mxu0 0.0
        %1461 = vmatprep.subr.mxu0 0.0
        %1462 = vmatpush1.msra.mxu0 0.0
        %1463 = vmatprep.subr.mxu0 0.0
        %1464 = vmatpush1.msra.mxu0 0.0
        %1465 = vmatprep.subr.mxu0 0.0
        %1466 = vmatpush1.msra.mxu0 0.0
        %1467 = vmatprep.subr.mxu0 0.0
        %1468 = vmatpush1.msra.mxu0 0.0
        %1469 = vmatprep.subr.mxu0 0.0
        %1470 = vmatpush1.msra.mxu0 0.0
        %1471 = vmatprep.subr.mxu0 0.0
        %1472 = vmatpush1.msra.mxu0 0.0
        %1473 = vmatprep.mubr.f32.mxu0 0.0
        %1474 = vmatmul.mubr.f32.gmra.mrb[0].mxu0 %v1385
        %v1475 = vpop.f32.mrb[0].mxu0
        %v1476 = vadd.f32 %v1407, %v1475
        %v1477 = vpop.f32.mrb[0].mxu0
        %1478 = vdwg.mxu0
        %1479 = vst [vmem:[%s690] sm:$0xff] %v1476
        %1480 = vst [vmem:[#allocation4] sm:$0xff] %v1284
        %v1481 = vld [vmem:[%s716] sm:$0xff]
        %1482 = vst [vmem:[#allocation4 + $0x8] sm:$0xff] %v1481
        %v1483 = vld [vmem:[#allocation4] sm:$0xff]
        %v1484 = vld [vmem:[#allocation4 + $0x8] sm:$0xff]
        %v1485 = vld [vmem:[%s15] sm:$0xff]
        %v1486 = vld [vmem:[%s15 + $0x8] sm:$0xff]
        %v1487 = vld [vmem:[%s15 + $0x10] sm:$0xff]
        %v1488 = vld [vmem:[%s15 + $0x18] sm:$0xff]
        %v1489 = vld [vmem:[%s15 + $0x20] sm:$0xff]
        %v1490 = vld [vmem:[%s15 + $0x28] sm:$0xff]
        %v1491 = vld [vmem:[%s15 + $0x30] sm:$0xff]
        %v1492 = vld [vmem:[%s15 + $0x38] sm:$0xff]
        %v1493 = vld [vmem:[%s15 + $0x40] sm:$0xff]
        %v1494 = vld [vmem:[%s15 + $0x48] sm:$0xff]
        %v1495 = vld [vmem:[%s15 + $0x50] sm:$0xff]
        %v1496 = vld [vmem:[%s15 + $0x58] sm:$0xff]
        %v1497 = vld [vmem:[%s15 + $0x60] sm:$0xff]
        %v1498 = vld [vmem:[%s15 + $0x68] sm:$0xff]
        %v1499 = vld [vmem:[%s15 + $0x70] sm:$0xff]
        %v1500 = vld [vmem:[%s15 + $0x78] sm:$0xff]
        %v1501 = vld [vmem:[%s15 + $0x80] sm:$0xff]
        %v1502 = vld [vmem:[%s15 + $0x88] sm:$0xff]
        %v1503 = vld [vmem:[%s15 + $0x90] sm:$0xff]
        %v1504 = vld [vmem:[%s15 + $0x98] sm:$0xff]
        %v1505 = vld [vmem:[%s15 + $0xa0] sm:$0xff]
        %v1506 = vld [vmem:[%s15 + $0xa8] sm:$0xff]
        %v1507 = vld [vmem:[%s15 + $0xb0] sm:$0xff]
        %v1508 = vld [vmem:[%s15 + $0xb8] sm:$0xff]
        %v1509 = vld [vmem:[%s15 + $0xc0] sm:$0xff]
        %v1510 = vld [vmem:[%s15 + $0xc8] sm:$0xff]
        %v1511 = vld [vmem:[%s15 + $0xd0] sm:$0xff]
        %v1512 = vld [vmem:[%s15 + $0xd8] sm:$0xff]
        %v1513 = vld [vmem:[%s15 + $0xe0] sm:$0xff]
        %v1514 = vld [vmem:[%s15 + $0xe8] sm:$0xff]
        %v1515 = vld [vmem:[%s15 + $0xf0] sm:$0xff]
        %v1516 = vld [vmem:[%s15 + $0xf8] sm:$0xff]
        %v1517 = vld [vmem:[%s16] sm:$0x1]
        %v1519 = vlaneseq
        %v1520 = vshrl.u32 %v1519, 7
        %v1521 = vsub.s32 0, %v1520
        %v1522 = vrot.slane %v1517, %v1521
        %1524 = vmatprep.subr.mxu0 0.0
        %1525 = vmatpush1.msra.mxu0 %v1485
        %1526 = vmatprep.subr.mxu0 0.0
        %1527 = vmatpush1.msra.mxu0 %v1486
        %1528 = vmatprep.subr.mxu0 0.0
        %1529 = vmatpush1.msra.mxu0 %v1487
        %1530 = vmatprep.subr.mxu0 0.0
        %1531 = vmatpush1.msra.mxu0 %v1488
        %1532 = vmatprep.subr.mxu0 0.0
        %1533 = vmatpush1.msra.mxu0 %v1489
        %1534 = vmatprep.subr.mxu0 0.0
        %1535 = vmatpush1.msra.mxu0 %v1490
        %1536 = vmatprep.subr.mxu0 0.0
        %1537 = vmatpush1.msra.mxu0 %v1491
        %1538 = vmatprep.subr.mxu0 0.0
        %1539 = vmatpush1.msra.mxu0 %v1492
        %1540 = vmatprep.subr.mxu0 0.0
        %1541 = vmatpush1.msra.mxu0 %v1493
        %1542 = vmatprep.subr.mxu0 0.0
        %1543 = vmatpush1.msra.mxu0 %v1494
        %1544 = vmatprep.subr.mxu0 0.0
        %1545 = vmatpush1.msra.mxu0 %v1495
        %1546 = vmatprep.subr.mxu0 0.0
        %1547 = vmatpush1.msra.mxu0 %v1496
        %1548 = vmatprep.subr.mxu0 0.0
        %1549 = vmatpush1.msra.mxu0 %v1497
        %1550 = vmatprep.subr.mxu0 0.0
        %1551 = vmatpush1.msra.mxu0 %v1498
        %1552 = vmatprep.subr.mxu0 0.0
        %1553 = vmatpush1.msra.mxu0 %v1499
        %1554 = vmatprep.subr.mxu0 0.0
        %1555 = vmatpush1.msra.mxu0 %v1500
        %1556 = vmatprep.subr.mxu0 0.0
        %1557 = vmatpush1.msra.mxu0 %v1501
        %1558 = vmatprep.subr.mxu0 0.0
        %1559 = vmatpush1.msra.mxu0 %v1502
        %1560 = vmatprep.subr.mxu0 0.0
        %1561 = vmatpush1.msra.mxu0 %v1503
        %1562 = vmatprep.subr.mxu0 0.0
        %1563 = vmatpush1.msra.mxu0 %v1504
        %1564 = vmatprep.subr.mxu0 0.0
        %1565 = vmatpush1.msra.mxu0 %v1505
        %1566 = vmatprep.subr.mxu0 0.0
        %1567 = vmatpush1.msra.mxu0 %v1506
        %1568 = vmatprep.subr.mxu0 0.0
        %1569 = vmatpush1.msra.mxu0 %v1507
        %1570 = vmatprep.subr.mxu0 0.0
        %1571 = vmatpush1.msra.mxu0 %v1508
        %1572 = vmatprep.subr.mxu0 0.0
        %1573 = vmatpush1.msra.mxu0 %v1509
        %1574 = vmatprep.subr.mxu0 0.0
        %1575 = vmatpush1.msra.mxu0 %v1510
        %1576 = vmatprep.subr.mxu0 0.0
        %1577 = vmatpush1.msra.mxu0 %v1511
        %1578 = vmatprep.subr.mxu0 0.0
        %1579 = vmatpush1.msra.mxu0 %v1512
        %1580 = vmatprep.subr.mxu0 0.0
        %1581 = vmatpush1.msra.mxu0 %v1513
        %1582 = vmatprep.subr.mxu0 0.0
        %1583 = vmatpush1.msra.mxu0 %v1514
        %1584 = vmatprep.subr.mxu0 0.0
        %1585 = vmatpush1.msra.mxu0 %v1515
        %1586 = vmatprep.subr.mxu0 0.0
        %1587 = vmatpush1.msra.mxu0 %v1516
        %1588 = vmatprep.mubr.f32.mxu0 %v1484
        %1589 = vmatmul.mubr.f32.gmra.mrb[0].mxu0 %v1483
        %v1590 = vpop.f32.mrb[0].mxu0
        %v1591 = vadd.f32 %v1522, %v1590
        %v1592 = vpop.f32.mrb[0].mxu0
        %1593 = vdwg.mxu0
        %vm1594 = vcmp.gt.f32.partialorder %v1591, 0.0
        %v1595 = vmin.f32 %v1591, 0.0
        %v1596 = vmul.f32 %v1595, 1.442695
        %v1597 = vpow.pop %v1596
        %v1598 = vsub.f32 %v1597, 1.0
        %v1599 = vsel %vm1594, %v1591, %v1598
        %v1600 = vld [vmem:[%s17] sm:$0xff]
        %v1601 = vld [vmem:[%s17 + $0x8] sm:$0xff]
        %v1602 = vld [vmem:[%s17 + $0x10] sm:$0xff]
        %v1603 = vld [vmem:[%s17 + $0x18] sm:$0xff]
        %v1604 = vld [vmem:[%s17 + $0x20] sm:$0xff]
        %v1605 = vld [vmem:[%s17 + $0x28] sm:$0xff]
        %v1606 = vld [vmem:[%s17 + $0x30] sm:$0xff]
        %v1607 = vld [vmem:[%s17 + $0x38] sm:$0xff]
        %v1608 = vld [vmem:[%s17 + $0x40] sm:$0xff]
        %v1609 = vld [vmem:[%s17 + $0x48] sm:$0xff]
        %v1610 = vld [vmem:[%s17 + $0x50] sm:$0xff]
        %v1611 = vld [vmem:[%s17 + $0x58] sm:$0xff]
        %v1612 = vld [vmem:[%s17 + $0x60] sm:$0xff]
        %v1613 = vld [vmem:[%s17 + $0x68] sm:$0xff]
        %v1614 = vld [vmem:[%s17 + $0x70] sm:$0xff]
        %v1615 = vld [vmem:[%s17 + $0x78] sm:$0xff]
        %v1616 = vld [vmem:[%s18] sm:$0x1]
        %v1618 = vlaneseq
        %v1619 = vshrl.u32 %v1618, 7
        %v1620 = vsub.s32 0, %v1619
        %v1621 = vrot.slane %v1616, %v1620
        %1623 = vmatprep.subr.mxu0 0.0
        %1624 = vmatpush1.msra.mxu0 %v1600
        %1625 = vmatprep.subr.mxu0 0.0
        %1626 = vmatpush1.msra.mxu0 %v1601
        %1627 = vmatprep.subr.mxu0 0.0
        %1628 = vmatpush1.msra.mxu0 %v1602
        %1629 = vmatprep.subr.mxu0 0.0
        %1630 = vmatpush1.msra.mxu0 %v1603
        %1631 = vmatprep.subr.mxu0 0.0
        %1632 = vmatpush1.msra.mxu0 %v1604
        %1633 = vmatprep.subr.mxu0 0.0
        %1634 = vmatpush1.msra.mxu0 %v1605
        %1635 = vmatprep.subr.mxu0 0.0
        %1636 = vmatpush1.msra.mxu0 %v1606
        %1637 = vmatprep.subr.mxu0 0.0
        %1638 = vmatpush1.msra.mxu0 %v1607
        %1639 = vmatprep.subr.mxu0 0.0
        %1640 = vmatpush1.msra.mxu0 %v1608
        %1641 = vmatprep.subr.mxu0 0.0
        %1642 = vmatpush1.msra.mxu0 %v1609
        %1643 = vmatprep.subr.mxu0 0.0
        %1644 = vmatpush1.msra.mxu0 %v1610
        %1645 = vmatprep.subr.mxu0 0.0
        %1646 = vmatpush1.msra.mxu0 %v1611
        %1647 = vmatprep.subr.mxu0 0.0
        %1648 = vmatpush1.msra.mxu0 %v1612
        %1649 = vmatprep.subr.mxu0 0.0
        %1650 = vmatpush1.msra.mxu0 %v1613
        %1651 = vmatprep.subr.mxu0 0.0
        %1652 = vmatpush1.msra.mxu0 %v1614
        %1653 = vmatprep.subr.mxu0 0.0
        %1654 = vmatpush1.msra.mxu0 %v1615
        %1655 = vmatprep.subr.mxu0 0.0
        %1656 = vmatpush1.msra.mxu0 0.0
        %1657 = vmatprep.subr.mxu0 0.0
        %1658 = vmatpush1.msra.mxu0 0.0
        %1659 = vmatprep.subr.mxu0 0.0
        %1660 = vmatpush1.msra.mxu0 0.0
        %1661 = vmatprep.subr.mxu0 0.0
        %1662 = vmatpush1.msra.mxu0 0.0
        %1663 = vmatprep.subr.mxu0 0.0
        %1664 = vmatpush1.msra.mxu0 0.0
        %1665 = vmatprep.subr.mxu0 0.0
        %1666 = vmatpush1.msra.mxu0 0.0
        %1667 = vmatprep.subr.mxu0 0.0
        %1668 = vmatpush1.msra.mxu0 0.0
        %1669 = vmatprep.subr.mxu0 0.0
        %1670 = vmatpush1.msra.mxu0 0.0
        %1671 = vmatprep.subr.mxu0 0.0
        %1672 = vmatpush1.msra.mxu0 0.0
        %1673 = vmatprep.subr.mxu0 0.0
        %1674 = vmatpush1.msra.mxu0 0.0
        %1675 = vmatprep.subr.mxu0 0.0
        %1676 = vmatpush1.msra.mxu0 0.0
        %1677 = vmatprep.subr.mxu0 0.0
        %1678 = vmatpush1.msra.mxu0 0.0
        %1679 = vmatprep.subr.mxu0 0.0
        %1680 = vmatpush1.msra.mxu0 0.0
        %1681 = vmatprep.subr.mxu0 0.0
        %1682 = vmatpush1.msra.mxu0 0.0
        %1683 = vmatprep.subr.mxu0 0.0
        %1684 = vmatpush1.msra.mxu0 0.0
        %1685 = vmatprep.subr.mxu0 0.0
        %1686 = vmatpush1.msra.mxu0 0.0
        %1687 = vmatprep.mubr.f32.mxu0 0.0
        %1688 = vmatmul.mubr.f32.gmra.mrb[0].mxu0 %v1599
        %v1689 = vpop.f32.mrb[0].mxu0
        %v1690 = vadd.f32 %v1621, %v1689
        %v1691 = vpop.f32.mrb[0].mxu0
        %1692 = vdwg.mxu0
        %1693 = vst [vmem:[%s697] sm:$0xff] %v1690
        %s1694 = sand.u32 %s466, 1
        %s1695 = scalar_lea.sflag [#allocation6], %s1694
        %s1696 = sand.u32 %s466, 1
        %s1697 = smul.addr %s1696, 8
        %s1698 = scalar_lea.vmem [#allocation5], %s1697
        %s1699 = sand.u32 %s39, 1
        %s1700 = scalar_lea.sflag [#allocation8], %s1699
        %s1701 = sand.u32 %s492, 1
        %s1702 = smul.addr %s1701, 8
        %s1703 = scalar_lea.vmem [#allocation7], %s1702
        %s1704 = sand.u32 %s39, 1
        %s1705 = scalar_lea.sflag [#allocation8], %s1704
        %s1706 = sand.u32 %s518, 1
        %s1707 = smul.addr %s1706, 8
        %s1708 = scalar_lea.vmem [#allocation9], %s1707
        // Predicated region
        $region101: #{rssm_forward.1} parent=95 // pred_check
          %p1709 = pneg %p476
        $region102: #{rssm_forward.1} parent=95 // pred_check_branch
          %1711 = sbr.rel (%p1709) target = $region104
        $region103: #{rssm_forward.1} parent=95 // pred_region
          %s1713 = ssub.s32 128, 128
          %1714 = vsyncadd %s1695, %s1713
          %s1715 = smul.addr %s39, 128
          %s1716 = scalar_lea.hbm %s19, %s1715
          %s1718 = sshll.u32 %s1698, 4
          %s1719 = int_to_ptr.vmem [resolvable:$true] %s1718
          %1721 = dma.vmem_to_hbm [thread:$0]  %s1719, 128, %s1716, %s1695
        $region104: #{rssm_forward.1} parent=95 // pred_fallthru
          _
        // Predicated region
        $region105: #{rssm_forward.1} parent=95 // pred_check
          %p1722 = pneg %p502
        $region106: #{rssm_forward.1} parent=95 // pred_check_branch
          %1724 = sbr.rel (%p1722) target = $region108
        $region107: #{rssm_forward.1} parent=95 // pred_region
          %s1726 = ssub.s32 128, 128
          %1727 = vsyncadd %s1700, %s1726
          %s1728 = smul.addr %s39, 128
          %s1729 = scalar_lea.hbm %s20, %s1728
          %s1731 = sshll.u32 %s1703, 4
          %s1732 = int_to_ptr.vmem [resolvable:$true] %s1731
          %1734 = dma.vmem_to_hbm [thread:$0]  %s1732, 128, %s1729, %s1700
        $region108: #{rssm_forward.1} parent=95 // pred_fallthru
          _
        // Predicated region
        $region109: #{rssm_forward.1} parent=95 // pred_check
          %p1735 = pneg %p528
        $region110: #{rssm_forward.1} parent=95 // pred_check_branch
          %1737 = sbr.rel (%p1735) target = $region112
        $region111: #{rssm_forward.1} parent=95 // pred_region
          %s1739 = ssub.s32 128, 128
          %1740 = vsyncadd %s1705, %s1739
          %s1741 = smul.addr %s39, 128
          %s1742 = scalar_lea.hbm %s21, %s1741
          %s1744 = sshll.u32 %s1708, 4
          %s1745 = int_to_ptr.vmem [resolvable:$true] %s1744
          %1747 = dma.vmem_to_hbm [thread:$0]  %s1745, 128, %s1742, %s1705
        $region112: #{rssm_forward.1} parent=95 // pred_fallthru
          _
      $region96: #{rssm_forward.1} parent=5 // pred_fallthru
        _
      %p1748 = scmp.le.s32.totalorder 2, %s34
      // Predicated region
      $region113: #{rssm_forward.1} parent=5 // pred_check
        %p1749 = pneg %p1748
      $region114: #{rssm_forward.1} parent=5 // pred_check_branch
        %1751 = sbr.rel (%p1749) target = $region116
      $region115: #{rssm_forward.1} parent=5 // pred_region
        %s1752 = ssub.s32 %s34, 2
        // Predicated region
        $region117: #{rssm_forward.1} parent=115 // pred_check
          %p1753 = pneg %p482
        $region118: #{rssm_forward.1} parent=115 // pred_check_branch
          %1755 = sbr.rel (%p1753) target = $region120
        $region119: #{rssm_forward.1} parent=115 // pred_region
          %s1756 = sand.u32 %s467, 1
          %s1757 = scalar_lea.sflag [#allocation6], %s1756
          %s1758 = sand.u32 %s467, 1
          %s1759 = smul.addr %s1758, 8
          %s1760 = scalar_lea.vmem [#allocation5], %s1759
          %1761 = dma.done %s1757, 128
        $region120: #{rssm_forward.1} parent=115 // pred_fallthru
          _
        // Predicated region
        $region121: #{rssm_forward.1} parent=115 // pred_check
          %p1762 = pneg %p508
        $region122: #{rssm_forward.1} parent=115 // pred_check_branch
          %1764 = sbr.rel (%p1762) target = $region124
        $region123: #{rssm_forward.1} parent=115 // pred_region
          %s1765 = sand.u32 %s40, 1
          %s1766 = scalar_lea.sflag [#allocation8], %s1765
          %s1767 = sand.u32 %s493, 1
          %s1768 = smul.addr %s1767, 8
          %s1769 = scalar_lea.vmem [#allocation7], %s1768
          %1770 = dma.done %s1766, 128
        $region124: #{rssm_forward.1} parent=115 // pred_fallthru
          _
        // Predicated region
        $region125: #{rssm_forward.1} parent=115 // pred_check
          %p1771 = pneg %p534
        $region126: #{rssm_forward.1} parent=115 // pred_check_branch
          %1773 = sbr.rel (%p1771) target = $region128
        $region127: #{rssm_forward.1} parent=115 // pred_region
          %s1774 = sand.u32 %s40, 1
          %s1775 = scalar_lea.sflag [#allocation8], %s1774
          %s1776 = sand.u32 %s519, 1
          %s1777 = smul.addr %s1776, 8
          %s1778 = scalar_lea.vmem [#allocation9], %s1777
          %1779 = dma.done %s1775, 128
        $region128: #{rssm_forward.1} parent=115 // pred_fallthru
          _
      $region116: #{rssm_forward.1} parent=5 // pred_fallthru
        _
    $region6: #{rssm_forward.1} parent=1 // loop_footer
      %s38 = sadd.s32 1, %s34
    $region7: #{rssm_forward.1} parent=1 // loop_footer_branch
      %33 = sbr.rel target = $region3
    $region8: #{rssm_forward.1} parent=1 // loop_exit
      _
    %1780 = vsyncpa [#allocation6], 1
    %s1781 = scalar_lea.sflag [#allocation6], 1
    %1782 = vsyncpa %s1781, 1
    %1783 = vsyncpa [#allocation8], 1
    %s1784 = scalar_lea.sflag [#allocation8], 1
    %1785 = vsyncpa %s1784, 1

</llo_original>
